<compile_context>
chip_gen: v5e
topology: v5e:2x2
jax: 0.10.0
libtpu: 0.0.40
codegen_flags: <defaults>
</compile_context>

<pallas_src>
import numpy as np
import jax
import jax.numpy as jnp
from jax.experimental import pallas as pl
from jax.experimental.pallas import tpu as pltpu


# ----------------------------------------------------------------------------
# Pallas kernel: whole SegMapEncoder forward for one batch element per step
# ----------------------------------------------------------------------------
def make_segmap_encoder_kernel(H, W, p, kh, kw, hidden, c2):
    M1 = H * W
    Hp, Wp = H + 2 * p, W + 2 * p

    def kernel(cols1_ref, w1_ref, b1_ref, w2_ref, b2_ref, out_ref, apad_ref):
        # ---- shared conv: taps folded into K (bf16 x bf16 -> f32 acc) ------
        acts = jnp.dot(cols1_ref[0], w1_ref[...],
                       preferred_element_type=jnp.float32)
        acts = jnp.maximum(acts + b1_ref[...], 0.0)           # bias + ReLU (f32)

        # ---- zero-padded activation kept entirely in VMEM (no HBM trip) ----
        apad_ref[...] = jnp.zeros((Hp, Wp, hidden), jnp.float32)
        apad_ref[p:p + H, p:p + W, :] = acts.reshape(H, W, hidden)

        # ---- fused gamma||beta conv: kh*kw taps, K=hidden each on the MXU --
        acc = jnp.zeros((M1, c2), jnp.float32)
        t = 0
        for dy in range(kh):                                   # static unroll
            for dx in range(kw):
                tap = apad_ref[dy:dy + H, dx:dx + W, :].reshape(M1, hidden)
                acc = acc + jnp.dot(tap.astype(jnp.bfloat16), w2_ref[t],
                                    preferred_element_type=jnp.float32)
                t += 1
        out_ref[0] = acc + b2_ref[...]

    return kernel


# ----------------------------------------------------------------------------
# Wrapper: layout glue + pallas_call
# ----------------------------------------------------------------------------
def segmap_encoder_pallas(params, seg_nchw):
    w_sh, b_sh = params["w_sh"], params["b_sh"]
    w_g, b_g = params["w_g"], params["b_g"]
    w_b, b_b = params["w_b"], params["b_b"]

    hidden, L, kh, kw = w_sh.shape
    out_ch = w_g.shape[0]
    N, L2, H, W = seg_nchw.shape
    assert L == L2 and kh == kw and kh % 2 == 1
    p = kh // 2
    M1 = H * W
    C2 = 2 * out_ch

    # --- folded im2col of the (tiny) segmentation map, built once -----------
    seg = jnp.transpose(seg_nchw, (0, 2, 3, 1)).astype(jnp.float32)     # NHWC
    segp = jnp.pad(seg, ((0, 0), (p, p), (p, p), (0, 0)))
    taps = [segp[:, dy:dy + H, dx:dx + W, :]
            for dy in range(kh) for dx in range(kw)]
    K1 = kh * kw * L
    cols1 = jnp.concatenate(taps, axis=-1).reshape(N, M1, K1)
    K1p = ((K1 + 127) // 128) * 128                       # lane-align the K dim
    cols1 = jnp.pad(cols1, ((0, 0), (0, 0), (0, K1p - K1))).astype(jnp.bfloat16)

    # --- weights: shared conv folded over taps; gamma/beta fused on Cout ----
    w1 = jnp.transpose(w_sh, (2, 3, 1, 0)).reshape(K1, hidden)
    w1 = jnp.pad(w1, ((0, K1p - K1), (0, 0))).astype(jnp.bfloat16)
    b1 = b_sh.reshape(1, hidden).astype(jnp.float32)

    wgb = jnp.concatenate([w_g, w_b], axis=0)             # (2*out, hidden, kh, kw)
    w2 = jnp.transpose(wgb, (2, 3, 1, 0)).reshape(kh * kw, hidden, C2)
    w2 = w2.astype(jnp.bfloat16)
    b2 = jnp.concatenate([b_g, b_b]).reshape(1, C2).astype(jnp.float32)

    kernel = make_segmap_encoder_kernel(H, W, p, kh, kw, hidden, C2)

    out = pl.pallas_call(
        kernel,
        out_shape=jax.ShapeDtypeStruct((N, M1, C2), jnp.float32),
        grid=(N,),
        in_specs=[
            pl.BlockSpec((1, M1, K1p), lambda n: (n, 0, 0)),
            pl.BlockSpec((K1p, hidden), lambda n: (0, 0)),
            pl.BlockSpec((1, hidden), lambda n: (0, 0)),
            pl.BlockSpec((kh * kw, hidden, C2), lambda n: (0, 0, 0)),
            pl.BlockSpec((1, C2), lambda n: (0, 0)),
        ],
        out_specs=pl.BlockSpec((1, M1, C2), lambda n: (n, 0, 0)),
        scratch_shapes=[pltpu.VMEM((H + 2 * p, W + 2 * p, hidden), jnp.float32)],
        compiler_params=pltpu.CompilerParams(dimension_semantics=("parallel",)),
    )(cols1, w1, b1, w2, b2)

    out = out.reshape(N, H, W, C2)
    gamma = jnp.transpose(out[..., :out_ch], (0, 3, 1, 2))   # back to NCHW
    beta = jnp.transpose(out[..., out_ch:], (0, 3, 1, 2))
    return gamma, beta


# ----------------------------------------------------------------------------
# Parameters (deterministic synthetic init matching PyTorch module shapes)
# ----------------------------------------------------------------------------
def init_conv(key, cin, cout, k):
    k_w, k_b = jax.random.split(key)
    fan_in = cin * k * k
    w = jax.random.normal(k_w, (cout, cin, k, k), jnp.float32) / np.sqrt(fan_in)
    b = jax.random.normal(k_b, (cout,), jnp.float32) * 0.05
    return w, b


def init_params(key, num_labels, out_channels, kernel_size, hidden=128):
    k1, k2, k3 = jax.random.split(key, 3)
    w_sh, b_sh = init_conv(k1, num_labels, hidden, kernel_size)
    w_g, b_g = init_conv(k2, hidden, out_channels, kernel_size)
    w_b, b_b = init_conv(k3, hidden, out_channels, kernel_size)
    return dict(w_sh=w_sh, b_sh=b_sh, w_g=w_g, b_g=b_g, w_b=w_b, b_b=b_b)


# ----------------------------------------------------------------------------
# Pure-JAX reference (mirrors the PyTorch forward) for verification
# ----------------------------------------------------------------------------
def ref_forward(params, seg):
    def conv(x, w, b, pad):
        out = jax.lax.conv_general_dilated(
            x, w, (1, 1), [(pad, pad), (pad, pad)],
            dimension_numbers=("NCHW", "OIHW", "NCHW"),
            precision=jax.lax.Precision.HIGHEST)
        return out + b[None, :, None, None]

    pad = params["w_sh"].shape[-1] // 2
    actv = jax.nn.relu(conv(seg, params["w_sh"], params["b_sh"], pad))
    gamma = conv(actv, params["w_g"], params["b_g"], pad)
    beta = conv(actv, params["w_b"], params["b_b"], pad)
    return gamma, beta


# ----------------------------------------------------------------------------
if __name__ == "__main__":
    key = jax.random.PRNGKey(0)
    N, num_labels, H, W = 2, 4, 16, 16
    out_channels, kernel_size = 16, 3

    k_p, k_s = jax.random.split(key)
    params = init_params(k_p, num_labels, out_channels, kernel_size)
    seg = jax.random.normal(k_s, (N, num_labels, H, W), jnp.float32)

    fwd = jax.jit(segmap_encoder_pallas)
    gamma, beta = jax.block_until_ready(fwd(params, seg))

    assert gamma.shape == (N, out_channels, H, W)
    assert beta.shape == (N, out_channels, H, W)

    g_ref, b_ref = ref_forward(params, seg)
    np.testing.assert_allclose(np.asarray(gamma), np.asarray(g_ref),
                               rtol=2e-2, atol=2e-2)
    np.testing.assert_allclose(np.asarray(beta), np.asarray(b_ref),
                               rtol=2e-2, atol=2e-2)

    print("KERNEL_OK")
</pallas_src>

<mosaic_0001>
module attributes {stable_mosaic.version = 11 : i64} {
  func.func @kernel(%arg0: i32, %arg1: memref<1x256x128xbf16, #tpu.memory_space<vmem>>, %arg2: memref<128x128xbf16, #tpu.memory_space<vmem>>, %arg3: memref<1x128xf32, #tpu.memory_space<vmem>>, %arg4: memref<9x128x32xbf16, #tpu.memory_space<vmem>>, %arg5: memref<1x32xf32, #tpu.memory_space<vmem>>, %arg6: memref<1x256x32xf32, #tpu.memory_space<vmem>>, %arg7: memref<18x18x128xf32, #tpu.memory_space<vmem>>) attributes {dimension_semantics = [#tpu.dimension_semantics<parallel>], iteration_bounds = array<i64: 2>, scalar_prefetch = 0 : i64, scratch_operands = 1 : i64, tpu.core_type = #tpu.core_type<tc>, window_params = [{transform_indices = @transform_0, window_bounds = array<i64: 1, 256, 128>}, {pipeline_mode = #tpu.pipeline_mode<synchronous>, transform_indices = @transform_1, window_bounds = array<i64: 128, 128>}, {pipeline_mode = #tpu.pipeline_mode<synchronous>, transform_indices = @transform_2, window_bounds = array<i64: 1, 128>}, {pipeline_mode = #tpu.pipeline_mode<synchronous>, transform_indices = @transform_3, window_bounds = array<i64: 9, 128, 32>}, {pipeline_mode = #tpu.pipeline_mode<synchronous>, transform_indices = @transform_4, window_bounds = array<i64: 1, 32>}, {transform_indices = @transform_5, window_bounds = array<i64: 1, 256, 32>}]} {
    %c0 = arith.constant 0 : index
    %c0_0 = arith.constant 0 : index
    %c0_1 = arith.constant 0 : index
    %0 = vector.load %arg1[%c0, %c0_0, %c0_1] : memref<1x256x128xbf16, #tpu.memory_space<vmem>>, vector<1x256x128xbf16>
    %1 = vector.shape_cast %0 : vector<1x256x128xbf16> to vector<256x128xbf16>
    %c0_2 = arith.constant 0 : index
    %c0_3 = arith.constant 0 : index
    %2 = vector.load %arg2[%c0_2, %c0_3] : memref<128x128xbf16, #tpu.memory_space<vmem>>, vector<128x128xbf16>
    %cst = arith.constant dense<0.000000e+00> : vector<256x128xf32>
    %3 = tpu.matmul %1, %2, %cst {dimension_numbers = #tpu.dot_dimension_numbers<[1], [0], [0], [1], [0, 0, 1, 1], [], []>} : vector<256x128xbf16>, vector<128x128xbf16>, vector<256x128xf32> -> vector<256x128xf32>
    %c0_4 = arith.constant 0 : index
    %c0_5 = arith.constant 0 : index
    %4 = vector.load %arg3[%c0_4, %c0_5] : memref<1x128xf32, #tpu.memory_space<vmem>>, vector<1x128xf32>
    %5 = vector.broadcast %4 : vector<1x128xf32> to vector<256x128xf32>
    %6 = arith.addf %3, %5 : vector<256x128xf32>
    %cst_6 = arith.constant 0.000000e+00 : f32
    %7 = vector.broadcast %cst_6 : f32 to vector<256x128xf32>
    %8 = arith.maximumf %6, %7 : vector<256x128xf32>
    %cst_7 = arith.constant 0.000000e+00 : f32
    %9 = vector.broadcast %cst_7 : f32 to vector<18x18x128xf32>
    %c0_8 = arith.constant 0 : index
    %c0_9 = arith.constant 0 : index
    %c0_10 = arith.constant 0 : index
    %10 = vector.load %arg7[%c0_8, %c0_9, %c0_10] : memref<18x18x128xf32, #tpu.memory_space<vmem>>, vector<18x18x128xf32>
    tpu.vector_store %arg7[%c0_8, %c0_9, %c0_10], %9 {strides = array<i32>} : memref<18x18x128xf32, #tpu.memory_space<vmem>>, vector<18x18x128xf32>,
    %11 = vector.shape_cast %8 : vector<256x128xf32> to vector<16x16x128xf32>
    %c1 = arith.constant 1 : index
    %c1_11 = arith.constant 1 : index
    %c0_12 = arith.constant 0 : index
    %12 = vector.load %arg7[%c1, %c1_11, %c0_12] : memref<18x18x128xf32, #tpu.memory_space<vmem>>, vector<16x16x128xf32>
    tpu.vector_store %arg7[%c1, %c1_11, %c0_12], %11 {strides = array<i32>} : memref<18x18x128xf32, #tpu.memory_space<vmem>>, vector<16x16x128xf32>,
    %cst_13 = arith.constant 0.000000e+00 : f32
    %13 = vector.broadcast %cst_13 : f32 to vector<256x32xf32>
    %c0_14 = arith.constant 0 : index
    %c0_15 = arith.constant 0 : index
    %c0_16 = arith.constant 0 : index
    %14 = vector.load %arg7[%c0_14, %c0_15, %c0_16] : memref<18x18x128xf32, #tpu.memory_space<vmem>>, vector<16x16x128xf32>
    %15 = vector.shape_cast %14 : vector<16x16x128xf32> to vector<256x128xf32>
    %16 = arith.truncf %15 : vector<256x128xf32> to vector<256x128xbf16>
    %c0_17 = arith.constant 0 : index
    %c0_18 = arith.constant 0 : index
    %c0_19 = arith.constant 0 : index
    %17 = vector.load %arg4[%c0_17, %c0_18, %c0_19] : memref<9x128x32xbf16, #tpu.memory_space<vmem>>, vector<1x128x32xbf16>
    %18 = vector.shape_cast %17 : vector<1x128x32xbf16> to vector<128x32xbf16>
    %cst_20 = arith.constant dense<0.000000e+00> : vector<256x32xf32>
    %19 = tpu.matmul %16, %18, %cst_20 {dimension_numbers = #tpu.dot_dimension_numbers<[1], [0], [0], [1], [0, 0, 1, 1], [], []>} : vector<256x128xbf16>, vector<128x32xbf16>, vector<256x32xf32> -> vector<256x32xf32>
    %20 = arith.addf %13, %19 : vector<256x32xf32>
    %c0_21 = arith.constant 0 : index
    %c1_22 = arith.constant 1 : index
    %c0_23 = arith.constant 0 : index
    %21 = vector.load %arg7[%c0_21, %c1_22, %c0_23] : memref<18x18x128xf32, #tpu.memory_space<vmem>>, vector<16x16x128xf32>
    %22 = vector.shape_cast %21 : vector<16x16x128xf32> to vector<256x128xf32>
    %23 = arith.truncf %22 : vector<256x128xf32> to vector<256x128xbf16>
    %c1_24 = arith.constant 1 : index
    %c0_25 = arith.constant 0 : index
    %c0_26 = arith.constant 0 : index
    %24 = vector.load %arg4[%c1_24, %c0_25, %c0_26] : memref<9x128x32xbf16, #tpu.memory_space<vmem>>, vector<1x128x32xbf16>
    %25 = vector.shape_cast %24 : vector<1x128x32xbf16> to vector<128x32xbf16>
    %cst_27 = arith.constant dense<0.000000e+00> : vector<256x32xf32>
    %26 = tpu.matmul %23, %25, %cst_27 {dimension_numbers = #tpu.dot_dimension_numbers<[1], [0], [0], [1], [0, 0, 1, 1], [], []>} : vector<256x128xbf16>, vector<128x32xbf16>, vector<256x32xf32> -> vector<256x32xf32>
    %27 = arith.addf %20, %26 : vector<256x32xf32>
    %c0_28 = arith.constant 0 : index
    %c2 = arith.constant 2 : index
    %c0_29 = arith.constant 0 : index
    %28 = vector.load %arg7[%c0_28, %c2, %c0_29] : memref<18x18x128xf32, #tpu.memory_space<vmem>>, vector<16x16x128xf32>
    %29 = vector.shape_cast %28 : vector<16x16x128xf32> to vector<256x128xf32>
    %30 = arith.truncf %29 : vector<256x128xf32> to vector<256x128xbf16>
    %c2_30 = arith.constant 2 : index
    %c0_31 = arith.constant 0 : index
    %c0_32 = arith.constant 0 : index
    %31 = vector.load %arg4[%c2_30, %c0_31, %c0_32] : memref<9x128x32xbf16, #tpu.memory_space<vmem>>, vector<1x128x32xbf16>
    %32 = vector.shape_cast %31 : vector<1x128x32xbf16> to vector<128x32xbf16>
    %cst_33 = arith.constant dense<0.000000e+00> : vector<256x32xf32>
    %33 = tpu.matmul %30, %32, %cst_33 {dimension_numbers = #tpu.dot_dimension_numbers<[1], [0], [0], [1], [0, 0, 1, 1], [], []>} : vector<256x128xbf16>, vector<128x32xbf16>, vector<256x32xf32> -> vector<256x32xf32>
    %34 = arith.addf %27, %33 : vector<256x32xf32>
    %c1_34 = arith.constant 1 : index
    %c0_35 = arith.constant 0 : index
    %c0_36 = arith.constant 0 : index
    %35 = vector.load %arg7[%c1_34, %c0_35, %c0_36] : memref<18x18x128xf32, #tpu.memory_space<vmem>>, vector<16x16x128xf32>
    %36 = vector.shape_cast %35 : vector<16x16x128xf32> to vector<256x128xf32>
    %37 = arith.truncf %36 : vector<256x128xf32> to vector<256x128xbf16>
    %c3 = arith.constant 3 : index
    %c0_37 = arith.constant 0 : index
    %c0_38 = arith.constant 0 : index
    %38 = vector.load %arg4[%c3, %c0_37, %c0_38] : memref<9x128x32xbf16, #tpu.memory_space<vmem>>, vector<1x128x32xbf16>
    %39 = vector.shape_cast %38 : vector<1x128x32xbf16> to vector<128x32xbf16>
    %cst_39 = arith.constant dense<0.000000e+00> : vector<256x32xf32>
    %40 = tpu.matmul %37, %39, %cst_39 {dimension_numbers = #tpu.dot_dimension_numbers<[1], [0], [0], [1], [0, 0, 1, 1], [], []>} : vector<256x128xbf16>, vector<128x32xbf16>, vector<256x32xf32> -> vector<256x32xf32>
    %41 = arith.addf %34, %40 : vector<256x32xf32>
    %c1_40 = arith.constant 1 : index
    %c1_41 = arith.constant 1 : index
    %c0_42 = arith.constant 0 : index
    %42 = vector.load %arg7[%c1_40, %c1_41, %c0_42] : memref<18x18x128xf32, #tpu.memory_space<vmem>>, vector<16x16x128xf32>
    %43 = vector.shape_cast %42 : vector<16x16x128xf32> to vector<256x128xf32>
    %44 = arith.truncf %43 : vector<256x128xf32> to vector<256x128xbf16>
    %c4 = arith.constant 4 : index
    %c0_43 = arith.constant 0 : index
    %c0_44 = arith.constant 0 : index
    %45 = vector.load %arg4[%c4, %c0_43, %c0_44] : memref<9x128x32xbf16, #tpu.memory_space<vmem>>, vector<1x128x32xbf16>
    %46 = vector.shape_cast %45 : vector<1x128x32xbf16> to vector<128x32xbf16>
    %cst_45 = arith.constant dense<0.000000e+00> : vector<256x32xf32>
    %47 = tpu.matmul %44, %46, %cst_45 {dimension_numbers = #tpu.dot_dimension_numbers<[1], [0], [0], [1], [0, 0, 1, 1], [], []>} : vector<256x128xbf16>, vector<128x32xbf16>, vector<256x32xf32> -> vector<256x32xf32>
    %48 = arith.addf %41, %47 : vector<256x32xf32>
    %c1_46 = arith.constant 1 : index
    %c2_47 = arith.constant 2 : index
    %c0_48 = arith.constant 0 : index
    %49 = vector.load %arg7[%c1_46, %c2_47, %c0_48] : memref<18x18x128xf32, #tpu.memory_space<vmem>>, vector<16x16x128xf32>
    %50 = vector.shape_cast %49 : vector<16x16x128xf32> to vector<256x128xf32>
    %51 = arith.truncf %50 : vector<256x128xf32> to vector<256x128xbf16>
    %c5 = arith.constant 5 : index
    %c0_49 = arith.constant 0 : index
    %c0_50 = arith.constant 0 : index
    %52 = vector.load %arg4[%c5, %c0_49, %c0_50] : memref<9x128x32xbf16, #tpu.memory_space<vmem>>, vector<1x128x32xbf16>
    %53 = vector.shape_cast %52 : vector<1x128x32xbf16> to vector<128x32xbf16>
    %cst_51 = arith.constant dense<0.000000e+00> : vector<256x32xf32>
    %54 = tpu.matmul %51, %53, %cst_51 {dimension_numbers = #tpu.dot_dimension_numbers<[1], [0], [0], [1], [0, 0, 1, 1], [], []>} : vector<256x128xbf16>, vector<128x32xbf16>, vector<256x32xf32> -> vector<256x32xf32>
    %55 = arith.addf %48, %54 : vector<256x32xf32>
    %c2_52 = arith.constant 2 : index
    %c0_53 = arith.constant 0 : index
    %c0_54 = arith.constant 0 : index
    %56 = vector.load %arg7[%c2_52, %c0_53, %c0_54] : memref<18x18x128xf32, #tpu.memory_space<vmem>>, vector<16x16x128xf32>
    %57 = vector.shape_cast %56 : vector<16x16x128xf32> to vector<256x128xf32>
    %58 = arith.truncf %57 : vector<256x128xf32> to vector<256x128xbf16>
    %c6 = arith.constant 6 : index
    %c0_55 = arith.constant 0 : index
    %c0_56 = arith.constant 0 : index
    %59 = vector.load %arg4[%c6, %c0_55, %c0_56] : memref<9x128x32xbf16, #tpu.memory_space<vmem>>, vector<1x128x32xbf16>
    %60 = vector.shape_cast %59 : vector<1x128x32xbf16> to vector<128x32xbf16>
    %cst_57 = arith.constant dense<0.000000e+00> : vector<256x32xf32>
    %61 = tpu.matmul %58, %60, %cst_57 {dimension_numbers = #tpu.dot_dimension_numbers<[1], [0], [0], [1], [0, 0, 1, 1], [], []>} : vector<256x128xbf16>, vector<128x32xbf16>, vector<256x32xf32> -> vector<256x32xf32>
    %62 = arith.addf %55, %61 : vector<256x32xf32>
    %c2_58 = arith.constant 2 : index
    %c1_59 = arith.constant 1 : index
    %c0_60 = arith.constant 0 : index
    %63 = vector.load %arg7[%c2_58, %c1_59, %c0_60] : memref<18x18x128xf32, #tpu.memory_space<vmem>>, vector<16x16x128xf32>
    %64 = vector.shape_cast %63 : vector<16x16x128xf32> to vector<256x128xf32>
    %65 = arith.truncf %64 : vector<256x128xf32> to vector<256x128xbf16>
    %c7 = arith.constant 7 : index
    %c0_61 = arith.constant 0 : index
    %c0_62 = arith.constant 0 : index
    %66 = vector.load %arg4[%c7, %c0_61, %c0_62] : memref<9x128x32xbf16, #tpu.memory_space<vmem>>, vector<1x128x32xbf16>
    %67 = vector.shape_cast %66 : vector<1x128x32xbf16> to vector<128x32xbf16>
    %cst_63 = arith.constant dense<0.000000e+00> : vector<256x32xf32>
    %68 = tpu.matmul %65, %67, %cst_63 {dimension_numbers = #tpu.dot_dimension_numbers<[1], [0], [0], [1], [0, 0, 1, 1], [], []>} : vector<256x128xbf16>, vector<128x32xbf16>, vector<256x32xf32> -> vector<256x32xf32>
    %69 = arith.addf %62, %68 : vector<256x32xf32>
    %c2_64 = arith.constant 2 : index
    %c2_65 = arith.constant 2 : index
    %c0_66 = arith.constant 0 : index
    %70 = vector.load %arg7[%c2_64, %c2_65, %c0_66] : memref<18x18x128xf32, #tpu.memory_space<vmem>>, vector<16x16x128xf32>
    %71 = vector.shape_cast %70 : vector<16x16x128xf32> to vector<256x128xf32>
    %72 = arith.truncf %71 : vector<256x128xf32> to vector<256x128xbf16>
    %c8 = arith.constant 8 : index
    %c0_67 = arith.constant 0 : index
    %c0_68 = arith.constant 0 : index
    %73 = vector.load %arg4[%c8, %c0_67, %c0_68] : memref<9x128x32xbf16, #tpu.memory_space<vmem>>, vector<1x128x32xbf16>
    %74 = vector.shape_cast %73 : vector<1x128x32xbf16> to vector<128x32xbf16>
    %cst_69 = arith.constant dense<0.000000e+00> : vector<256x32xf32>
    %75 = tpu.matmul %72, %74, %cst_69 {dimension_numbers = #tpu.dot_dimension_numbers<[1], [0], [0], [1], [0, 0, 1, 1], [], []>} : vector<256x128xbf16>, vector<128x32xbf16>, vector<256x32xf32> -> vector<256x32xf32>
    %76 = arith.addf %69, %75 : vector<256x32xf32>
    %c0_70 = arith.constant 0 : index
    %c0_71 = arith.constant 0 : index
    %77 = vector.load %arg5[%c0_70, %c0_71] : memref<1x32xf32, #tpu.memory_space<vmem>>, vector<1x32xf32>
    %78 = vector.broadcast %77 : vector<1x32xf32> to vector<256x32xf32>
    %79 = arith.addf %76, %78 : vector<256x32xf32>
    %c0_72 = arith.constant 0 : index
    %c0_73 = arith.constant 0 : index
    %c0_74 = arith.constant 0 : index
    %80 = vector.load %arg6[%c0_72, %c0_73, %c0_74] : memref<1x256x32xf32, #tpu.memory_space<vmem>>, vector<1x256x32xf32>
    %81 = vector.shape_cast %80 : vector<1x256x32xf32> to vector<256x32xf32>
    %82 = vector.shape_cast %79 : vector<256x32xf32> to vector<1x256x32xf32>
    tpu.vector_store %arg6[%c0_72, %c0_73, %c0_74], %82 {strides = array<i32>} : memref<1x256x32xf32, #tpu.memory_space<vmem>>, vector<1x256x32xf32>,
    return
  }
  func.func @transform_0(%arg0: i32) -> (i32, i32, i32) {
    %c0_i32 = arith.constant 0 : i32
    %c0_i32_0 = arith.constant 0 : i32
    %c0_i32_1 = arith.constant 0 : i32
    return %arg0, %c0_i32, %c0_i32_0 : i32, i32, i32
  }
  func.func @transform_1(%arg0: i32) -> (i32, i32) {
    %c0_i32 = arith.constant 0 : i32
    %c0_i32_0 = arith.constant 0 : i32
    %c0_i32_1 = arith.constant 0 : i32
    return %c0_i32, %c0_i32_0 : i32, i32
  }
  func.func @transform_2(%arg0: i32) -> (i32, i32) {
    %c0_i32 = arith.constant 0 : i32
    %c0_i32_0 = arith.constant 0 : i32
    %c0_i32_1 = arith.constant 0 : i32
    return %c0_i32, %c0_i32_0 : i32, i32
  }
  func.func @transform_3(%arg0: i32) -> (i32, i32, i32) {
    %c0_i32 = arith.constant 0 : i32
    %c0_i32_0 = arith.constant 0 : i32
    %c0_i32_1 = arith.constant 0 : i32
    %c0_i32_2 = arith.constant 0 : i32
    return %c0_i32, %c0_i32_0, %c0_i32_1 : i32, i32, i32
  }
  func.func @transform_4(%arg0: i32) -> (i32, i32) {
    %c0_i32 = arith.constant 0 : i32
    %c0_i32_0 = arith.constant 0 : i32
    %c0_i32_1 = arith.constant 0 : i32
    return %c0_i32, %c0_i32_0 : i32, i32
  }
  func.func @transform_5(%arg0: i32) -> (i32, i32, i32) {
    %c0_i32 = arith.constant 0 : i32
    %c0_i32_0 = arith.constant 0 : i32
    %c0_i32_1 = arith.constant 0 : i32
    return %arg0, %c0_i32, %c0_i32_0 : i32, i32, i32
  }
}

</mosaic_0001>

<llo_original>
// kernel: segmap_encoder_pallas.1
$region0: #{segmap_encoder_pallas.1}
  #allocation0 [shape = 'u32[]', space=smem, size = 0x4, offset = 0x4, fixed_abs, tag = 'smem constant byte address 0x4 - core index']
  #allocation1 [shape = 'u32[72,128]{1,0:T(1,128)}', space=vmem, size = 0x9000, scoped, tag = 'internal scratch']
  #allocation2 [shape = 'f32[18,18,128]{2,1,0:T(8,128)}', space=vmem, size = 0x36000, scoped, tag = 'scratch operand']
  %s0 = inlined_call_operand.vmem [shape: bf16[2,256,128], index: 0, kind: input, shape index: {}]
  %s1 = inlined_call_operand.vmem [shape: bf16[128,128], index: 1, kind: input, shape index: {}]
  %s2 = inlined_call_operand.vmem [shape: f32[1,128], index: 2, kind: input, shape index: {}]
  %s3 = inlined_call_operand.vmem [shape: bf16[9,128,32], index: 3, kind: input, shape index: {}]
  %s4 = inlined_call_operand.vmem [shape: f32[1,32], index: 4, kind: input, shape index: {}]
  %s5 = inlined_call_operand.vmem [shape: f32[2,256,32], index: 5, kind: output, shape index: {}]
  %s6 = sld [smem:[#allocation0]]
  $region53: #{segmap_encoder_pallas.1} parent=0
    _
  %s8 = ssub.s32 1, %s6
  %s9 = scalar_select 0, %s8, %s6
  loop: start=0, step=1, limit=4
  $region2: #{segmap_encoder_pallas.1} parent=0 // loop_pre_header
    _
  $region3: #{segmap_encoder_pallas.1} parent=0 // loop_header
    %s11 = sphi 0, %s15
    %p12 = scmp.ge.s32.totalorder %s11, 4
    %s21 = sphi 0, %s23
    %s24 = sphi 0, %s21
    %s25 = sphi 0, %s24
    %s41 = sphi 0, %s25
    %s45 = sphi 0, %s45
    %s47 = sphi 0, %s45
    %s48 = sphi 0, %s47
    %s62 = sphi 0, %s48
    %s66 = sphi 0, %s66
    %s68 = sphi 0, %s66
    %s69 = sphi 0, %s68
    %s83 = sphi 0, %s69
    %s87 = sphi 0, %s87
    %s89 = sphi 0, %s87
    %s90 = sphi 0, %s89
    %s104 = sphi 0, %s90
    %s108 = sphi 0, %s108
    %s110 = sphi 0, %s108
    %s111 = sphi 0, %s110
    %s125 = sphi 0, %s111
    %s131 = sphi 0, %s133
    %s134 = sphi 0, %s131
    %s135 = sphi 0, %s134
    %s151 = sphi 0, %s135
  $region4: #{segmap_encoder_pallas.1} parent=0 // loop_header_branch
    %14 = sbr.rel (%p12) target = $region8
  $region5: #{segmap_encoder_pallas.1} parent=0 // loop_body
    %s16 = ssub.s32 %s11, 1
    %s17 = ssub.s32 %s11, 2
    %s18 = sadd.s32 %s11, 1
    %s19 = ssub.s32 %s11, %s18
    %p20 = scmp.eq.s32.totalorder %s19, 0
    %s22 = sadd.s32 %s21, 1
    %s23 = scalar_select %p20, %s21, %s22
    %p26 = pneg %p20
    %p27 = scmp.eq.s32.totalorder %s11, 1
    %p28 = por %p26, %p27
    %p29 = scmp.ne.s32.totalorder %s21, %s24
    %p30 = scmp.eq.s32.totalorder %s11, 0
    %p31 = por %p29, %p30
    %p32 = scmp.ne.s32.totalorder %s21, %s24
    %p33 = scmp.eq.s32.totalorder %s16, 1
    %p34 = por %p32, %p33
    %p35 = scmp.ne.s32.totalorder %s24, %s25
    %p36 = scmp.eq.s32.totalorder %s16, 0
    %p37 = por %p35, %p36
    %p38 = scmp.ne.s32.totalorder %s24, %s25
    %p39 = scmp.eq.s32.totalorder %s17, 1
    %p40 = por %p38, %p39
    %p42 = scmp.ne.s32.totalorder %s25, %s41
    %p43 = scmp.eq.s32.totalorder %s17, 0
    %p44 = por %p42, %p43
    %s46 = sadd.s32 %s45, 1
    %p49 = scmp.eq.s32.totalorder %s11, 1
    %p50 = scmp.ne.s32.totalorder %s45, %s47
    %p51 = scmp.eq.s32.totalorder %s11, 0
    %p52 = por %p50, %p51
    %p53 = scmp.ne.s32.totalorder %s45, %s47
    %p54 = scmp.eq.s32.totalorder %s16, 1
    %p55 = por %p53, %p54
    %p56 = scmp.ne.s32.totalorder %s47, %s48
    %p57 = scmp.eq.s32.totalorder %s16, 0
    %p58 = por %p56, %p57
    %p59 = scmp.ne.s32.totalorder %s47, %s48
    %p60 = scmp.eq.s32.totalorder %s17, 1
    %p61 = por %p59, %p60
    %p63 = scmp.ne.s32.totalorder %s48, %s62
    %p64 = scmp.eq.s32.totalorder %s17, 0
    %p65 = por %p63, %p64
    %s67 = sadd.s32 %s66, 1
    %p70 = scmp.eq.s32.totalorder %s11, 1
    %p71 = scmp.ne.s32.totalorder %s66, %s68
    %p72 = scmp.eq.s32.totalorder %s11, 0
    %p73 = por %p71, %p72
    %p74 = scmp.ne.s32.totalorder %s66, %s68
    %p75 = scmp.eq.s32.totalorder %s16, 1
    %p76 = por %p74, %p75
    %p77 = scmp.ne.s32.totalorder %s68, %s69
    %p78 = scmp.eq.s32.totalorder %s16, 0
    %p79 = por %p77, %p78
    %p80 = scmp.ne.s32.totalorder %s68, %s69
    %p81 = scmp.eq.s32.totalorder %s17, 1
    %p82 = por %p80, %p81
    %p84 = scmp.ne.s32.totalorder %s69, %s83
    %p85 = scmp.eq.s32.totalorder %s17, 0
    %p86 = por %p84, %p85
    %s88 = sadd.s32 %s87, 1
    %p91 = scmp.eq.s32.totalorder %s11, 1
    %p92 = scmp.ne.s32.totalorder %s87, %s89
    %p93 = scmp.eq.s32.totalorder %s11, 0
    %p94 = por %p92, %p93
    %p95 = scmp.ne.s32.totalorder %s87, %s89
    %p96 = scmp.eq.s32.totalorder %s16, 1
    %p97 = por %p95, %p96
    %p98 = scmp.ne.s32.totalorder %s89, %s90
    %p99 = scmp.eq.s32.totalorder %s16, 0
    %p100 = por %p98, %p99
    %p101 = scmp.ne.s32.totalorder %s89, %s90
    %p102 = scmp.eq.s32.totalorder %s17, 1
    %p103 = por %p101, %p102
    %p105 = scmp.ne.s32.totalorder %s90, %s104
    %p106 = scmp.eq.s32.totalorder %s17, 0
    %p107 = por %p105, %p106
    %s109 = sadd.s32 %s108, 1
    %p112 = scmp.eq.s32.totalorder %s11, 1
    %p113 = scmp.ne.s32.totalorder %s108, %s110
    %p114 = scmp.eq.s32.totalorder %s11, 0
    %p115 = por %p113, %p114
    %p116 = scmp.ne.s32.totalorder %s108, %s110
    %p117 = scmp.eq.s32.totalorder %s16, 1
    %p118 = por %p116, %p117
    %p119 = scmp.ne.s32.totalorder %s110, %s111
    %p120 = scmp.eq.s32.totalorder %s16, 0
    %p121 = por %p119, %p120
    %p122 = scmp.ne.s32.totalorder %s110, %s111
    %p123 = scmp.eq.s32.totalorder %s17, 1
    %p124 = por %p122, %p123
    %p126 = scmp.ne.s32.totalorder %s111, %s125
    %p127 = scmp.eq.s32.totalorder %s17, 0
    %p128 = por %p126, %p127
    %s129 = ssub.s32 %s11, %s18
    %p130 = scmp.eq.s32.totalorder %s129, 0
    %s132 = sadd.s32 %s131, 1
    %s133 = scalar_select %p130, %s131, %s132
    %p136 = pneg %p130
    %p137 = scmp.eq.s32.totalorder %s11, 1
    %p138 = por %p136, %p137
    %p139 = scmp.ne.s32.totalorder %s131, %s134
    %p140 = scmp.eq.s32.totalorder %s11, 0
    %p141 = por %p139, %p140
    %p142 = scmp.ne.s32.totalorder %s131, %s134
    %p143 = scmp.eq.s32.totalorder %s16, 1
    %p144 = por %p142, %p143
    %p145 = scmp.ne.s32.totalorder %s134, %s135
    %p146 = scmp.eq.s32.totalorder %s16, 0
    %p147 = por %p145, %p146
    %p148 = scmp.ne.s32.totalorder %s134, %s135
    %p149 = scmp.eq.s32.totalorder %s17, 1
    %p150 = por %p148, %p149
    %p152 = scmp.ne.s32.totalorder %s135, %s151
    %p153 = scmp.eq.s32.totalorder %s17, 0
    %p154 = por %p152, %p153
    %p155 = scmp.le.s32.totalorder 1, %s11
    %p156 = scmp.lt.s32.totalorder %s11, 3
    %p157 = pnand %p155, %p156
    %p158 = pneg %p157
    // Predicated region
    $region9: #{segmap_encoder_pallas.1} parent=5 // pred_check
      _
    $region10: #{segmap_encoder_pallas.1} parent=5 // pred_check_branch
      %160 = sbr.rel (%p157) target = $region12
    $region11: #{segmap_encoder_pallas.1} parent=5 // pred_region
      %s161 = ssub.s32 %s11, 1
      // Predicated region
      $region13: #{segmap_encoder_pallas.1} parent=11 // pred_check
        %p162 = pneg %p58
      $region14: #{segmap_encoder_pallas.1} parent=11 // pred_check_branch
        %164 = sbr.rel (%p162) target = $region16
      $region15: #{segmap_encoder_pallas.1} parent=11 // pred_region
        _
      $region16: #{segmap_encoder_pallas.1} parent=11 // pred_fallthru
        _
      // Predicated region
      $region17: #{segmap_encoder_pallas.1} parent=11 // pred_check
        %p165 = pneg %p79
      $region18: #{segmap_encoder_pallas.1} parent=11 // pred_check_branch
        %167 = sbr.rel (%p165) target = $region20
      $region19: #{segmap_encoder_pallas.1} parent=11 // pred_region
        _
      $region20: #{segmap_encoder_pallas.1} parent=11 // pred_fallthru
        _
      // Predicated region
      $region21: #{segmap_encoder_pallas.1} parent=11 // pred_check
        %p168 = pneg %p100
      $region22: #{segmap_encoder_pallas.1} parent=11 // pred_check_branch
        %170 = sbr.rel (%p168) target = $region24
      $region23: #{segmap_encoder_pallas.1} parent=11 // pred_region
        _
      $region24: #{segmap_encoder_pallas.1} parent=11 // pred_fallthru
        _
      // Predicated region
      $region25: #{segmap_encoder_pallas.1} parent=11 // pred_check
        %p171 = pneg %p121
      $region26: #{segmap_encoder_pallas.1} parent=11 // pred_check_branch
        %173 = sbr.rel (%p171) target = $region28
      $region27: #{segmap_encoder_pallas.1} parent=11 // pred_region
        _
      $region28: #{segmap_encoder_pallas.1} parent=11 // pred_fallthru
        _
    $region12: #{segmap_encoder_pallas.1} parent=5 // pred_fallthru
      _
    %p174 = scmp.lt.s32.totalorder %s11, 2
    // Predicated region
    $region29: #{segmap_encoder_pallas.1} parent=5 // pred_check
      %p175 = pneg %p174
    $region30: #{segmap_encoder_pallas.1} parent=5 // pred_check_branch
      %177 = sbr.rel (%p175) target = $region32
    $region31: #{segmap_encoder_pallas.1} parent=5 // pred_region
      // Predicated region
      $region33: #{segmap_encoder_pallas.1} parent=31 // pred_check
        %p178 = pneg %p31
      $region34: #{segmap_encoder_pallas.1} parent=31 // pred_check_branch
        %180 = sbr.rel (%p178) target = $region36
      $region35: #{segmap_encoder_pallas.1} parent=31 // pred_region
        %p181 = scmp.lt.s32.totalorder %s11, 1
        %s182 = scalar_select %p181, %s11, 1
        %s183 = smul.addr %s182, 32
        %s184 = smul.addr %s183, 4
        %s185 = scalar_lea.vmem %s0, %s184
      $region36: #{segmap_encoder_pallas.1} parent=31 // pred_fallthru
        _
    $region32: #{segmap_encoder_pallas.1} parent=5 // pred_fallthru
      _
    %p186 = scmp.le.s32.totalorder 1, %s11
    %p187 = scmp.lt.s32.totalorder %s11, 3
    %p188 = pnand %p186, %p187
    %p189 = pneg %p188
    // Predicated region
    $region37: #{segmap_encoder_pallas.1} parent=5 // pred_check
      _
    $region38: #{segmap_encoder_pallas.1} parent=5 // pred_check_branch
      %191 = sbr.rel (%p188) target = $region40
    $region39: #{segmap_encoder_pallas.1} parent=5 // pred_region
      %s192 = ssub.s32 %s11, 1
      %p193 = scmp.lt.s32.totalorder %s16, 1
      %s194 = scalar_select %p193, %s16, 1
      %s195 = smul.addr %s194, 32
      %s196 = smul.addr %s195, 4
      %s197 = scalar_lea.vmem %s0, %s196
      %p198 = pneg %p37
      %p199 = pneg %p34
      %p200 = pneg %p58
      %p201 = pneg %p55
      %p202 = pneg %p79
      %p203 = pneg %p76
      %p204 = pneg %p100
      %p205 = pneg %p97
      %p206 = pneg %p121
      %p207 = pneg %p118
      %p208 = pneg %p147
      %p209 = pneg %p144
      %p210 = scmp.lt.s32.totalorder %s16, 1
      %s211 = scalar_select %p210, %s16, 1
      %s212 = smul.addr %s211, 32
      %s213 = smul.addr %s212, 8
      %s214 = scalar_lea.vmem %s5, %s213
      %p215 = scmp.lt.s32.totalorder %s16, 1
      %s216 = scalar_select %p215, %s16, 1
      %s217 = smul.addr %s216, 32
      %s218 = smul.addr %s217, 4
      %s219 = scalar_lea.vmem %s0, %s218
      %p220 = scmp.lt.s32.totalorder %s16, 1
      %s221 = scalar_select %p220, %s16, 1
      %s222 = smul.addr %s221, 32
      %s223 = smul.addr %s222, 8
      %s224 = scalar_lea.vmem %s5, %s223
      %v225 = vld [vmem:[%s219] sm:$0xf]
      %v226 = vld [vmem:[%s219 + $0x4] sm:$0xf]
      %v227 = vld [vmem:[%s219 + $0x8] sm:$0xf]
      %v228 = vld [vmem:[%s219 + $0xc] sm:$0xf]
      %v229 = vld [vmem:[%s219 + $0x10] sm:$0xf]
      %v230 = vld [vmem:[%s219 + $0x14] sm:$0xf]
      %v231 = vld [vmem:[%s219 + $0x18] sm:$0xf]
      %v232 = vld [vmem:[%s219 + $0x1c] sm:$0xf]
      %v233 = vld [vmem:[%s219 + $0x20] sm:$0xf]
      %v234 = vld [vmem:[%s219 + $0x24] sm:$0xf]
      %v235 = vld [vmem:[%s219 + $0x28] sm:$0xf]
      %v236 = vld [vmem:[%s219 + $0x2c] sm:$0xf]
      %v237 = vld [vmem:[%s219 + $0x30] sm:$0xf]
      %v238 = vld [vmem:[%s219 + $0x34] sm:$0xf]
      %v239 = vld [vmem:[%s219 + $0x38] sm:$0xf]
      %v240 = vld [vmem:[%s219 + $0x3c] sm:$0xf]
      %v241 = vld [vmem:[%s219 + $0x40] sm:$0xf]
      %v242 = vld [vmem:[%s219 + $0x44] sm:$0xf]
      %v243 = vld [vmem:[%s219 + $0x48] sm:$0xf]
      %v244 = vld [vmem:[%s219 + $0x4c] sm:$0xf]
      %v245 = vld [vmem:[%s219 + $0x50] sm:$0xf]
      %v246 = vld [vmem:[%s219 + $0x54] sm:$0xf]
      %v247 = vld [vmem:[%s219 + $0x58] sm:$0xf]
      %v248 = vld [vmem:[%s219 + $0x5c] sm:$0xf]
      %v249 = vld [vmem:[%s219 + $0x60] sm:$0xf]
      %v250 = vld [vmem:[%s219 + $0x64] sm:$0xf]
      %v251 = vld [vmem:[%s219 + $0x68] sm:$0xf]
      %v252 = vld [vmem:[%s219 + $0x6c] sm:$0xf]
      %v253 = vld [vmem:[%s219 + $0x70] sm:$0xf]
      %v254 = vld [vmem:[%s219 + $0x74] sm:$0xf]
      %v255 = vld [vmem:[%s219 + $0x78] sm:$0xf]
      %v256 = vld [vmem:[%s219 + $0x7c] sm:$0xf]
      %v257 = vld [vmem:[%s1] sm:$0xf]
      %v258 = vld [vmem:[%s1 + $0x4] sm:$0xf]
      %v259 = vld [vmem:[%s1 + $0x8] sm:$0xf]
      %v260 = vld [vmem:[%s1 + $0xc] sm:$0xf]
      %v261 = vld [vmem:[%s1 + $0x10] sm:$0xf]
      %v262 = vld [vmem:[%s1 + $0x14] sm:$0xf]
      %v263 = vld [vmem:[%s1 + $0x18] sm:$0xf]
      %v264 = vld [vmem:[%s1 + $0x1c] sm:$0xf]
      %v265 = vld [vmem:[%s1 + $0x20] sm:$0xf]
      %v266 = vld [vmem:[%s1 + $0x24] sm:$0xf]
      %v267 = vld [vmem:[%s1 + $0x28] sm:$0xf]
      %v268 = vld [vmem:[%s1 + $0x2c] sm:$0xf]
      %v269 = vld [vmem:[%s1 + $0x30] sm:$0xf]
      %v270 = vld [vmem:[%s1 + $0x34] sm:$0xf]
      %v271 = vld [vmem:[%s1 + $0x38] sm:$0xf]
      %v272 = vld [vmem:[%s1 + $0x3c] sm:$0xf]
      %v273 = vld [vmem:[%s2] sm:$0x1]
      %v275 = vperm.slane %v273, 0
      %v309 = vunpack.c.l.b16 %v225
      %v310 = vunpack.c.l.b16 %v226
      %v311 = vunpack.c.l.b16 %v227
      %v312 = vunpack.c.l.b16 %v228
      %v313 = vunpack.c.l.b16 %v229
      %v314 = vunpack.c.l.b16 %v230
      %v315 = vunpack.c.l.b16 %v231
      %v316 = vunpack.c.l.b16 %v232
      %v317 = vunpack.c.l.b16 %v233
      %v318 = vunpack.c.l.b16 %v234
      %v319 = vunpack.c.l.b16 %v235
      %v320 = vunpack.c.l.b16 %v236
      %v321 = vunpack.c.l.b16 %v237
      %v322 = vunpack.c.l.b16 %v238
      %v323 = vunpack.c.l.b16 %v239
      %v324 = vunpack.c.l.b16 %v240
      %v325 = vunpack.c.l.b16 %v241
      %v326 = vunpack.c.l.b16 %v242
      %v327 = vunpack.c.l.b16 %v243
      %v328 = vunpack.c.l.b16 %v244
      %v329 = vunpack.c.l.b16 %v245
      %v330 = vunpack.c.l.b16 %v246
      %v331 = vunpack.c.l.b16 %v247
      %v332 = vunpack.c.l.b16 %v248
      %v333 = vunpack.c.l.b16 %v249
      %v334 = vunpack.c.l.b16 %v250
      %v335 = vunpack.c.l.b16 %v251
      %v336 = vunpack.c.l.b16 %v252
      %v337 = vunpack.c.l.b16 %v253
      %v338 = vunpack.c.l.b16 %v254
      %v339 = vunpack.c.l.b16 %v255
      %v340 = vunpack.c.l.b16 %v256
      %v341 = vpack.c.b16 %v310, %v309
      %v342 = vpack.c.b16 %v312, %v311
      %v343 = vpack.c.b16 %v314, %v313
      %v344 = vpack.c.b16 %v316, %v315
      %v345 = vpack.c.b16 %v318, %v317
      %v346 = vpack.c.b16 %v320, %v319
      %v347 = vpack.c.b16 %v322, %v321
      %v348 = vpack.c.b16 %v324, %v323
      %v349 = vpack.c.b16 %v326, %v325
      %v350 = vpack.c.b16 %v328, %v327
      %v351 = vpack.c.b16 %v330, %v329
      %v352 = vpack.c.b16 %v332, %v331
      %v353 = vpack.c.b16 %v334, %v333
      %v354 = vpack.c.b16 %v336, %v335
      %v355 = vpack.c.b16 %v338, %v337
      %v356 = vpack.c.b16 %v340, %v339
      %v389 = vunpack.c.l.b16 %v257
      %v390 = vunpack.c.l.b16 %v258
      %v391 = vunpack.c.l.b16 %v259
      %v392 = vunpack.c.l.b16 %v260
      %v393 = vunpack.c.l.b16 %v261
      %v394 = vunpack.c.l.b16 %v262
      %v395 = vunpack.c.l.b16 %v263
      %v396 = vunpack.c.l.b16 %v264
      %v397 = vunpack.c.l.b16 %v265
      %v398 = vunpack.c.l.b16 %v266
      %v399 = vunpack.c.l.b16 %v267
      %v400 = vunpack.c.l.b16 %v268
      %v401 = vunpack.c.l.b16 %v269
      %v402 = vunpack.c.l.b16 %v270
      %v403 = vunpack.c.l.b16 %v271
      %v404 = vunpack.c.l.b16 %v272
      %v405 = vpack.c.b16 %v390, %v389
      %v406 = vpack.c.b16 %v392, %v391
      %v407 = vpack.c.b16 %v394, %v393
      %v408 = vpack.c.b16 %v396, %v395
      %v409 = vpack.c.b16 %v398, %v397
      %v410 = vpack.c.b16 %v400, %v399
      %v411 = vpack.c.b16 %v402, %v401
      %v412 = vpack.c.b16 %v404, %v403
      %421 = vmatpush.bf16.msra.mxu0 %v412
      %422 = vmatpush.bf16.msra.mxu0 %v411
      %423 = vmatpush.bf16.msra.mxu0 %v410
      %424 = vmatpush.bf16.msra.mxu0 %v409
      %425 = vmatpush.bf16.msra.mxu0 %v408
      %426 = vmatpush.bf16.msra.mxu0 %v407
      %427 = vmatpush.bf16.msra.mxu0 %v406
      %428 = vmatpush.bf16.msra.mxu0 %v405
      %429 = vmatmul.bf16.gmra.mxu0 %v341
      %v430 = vpop.f32.mrf.mxu0
      %v431 = vadd.f32 %v275, %v430
      %v432 = vpop.f32.mrf.mxu0
      %v433 = vadd.f32 %v275, %v432
      %434 = vmatmul.bf16.gmra.mxu0 %v342
      %v435 = vpop.f32.mrf.mxu0
      %v436 = vadd.f32 %v275, %v435
      %v437 = vpop.f32.mrf.mxu0
      %v438 = vadd.f32 %v275, %v437
      %439 = vmatmul.bf16.gmra.mxu0 %v343
      %v440 = vpop.f32.mrf.mxu0
      %v441 = vadd.f32 %v275, %v440
      %v442 = vpop.f32.mrf.mxu0
      %v443 = vadd.f32 %v275, %v442
      %444 = vmatmul.bf16.gmra.mxu0 %v344
      %v445 = vpop.f32.mrf.mxu0
      %v446 = vadd.f32 %v275, %v445
      %v447 = vpop.f32.mrf.mxu0
      %v448 = vadd.f32 %v275, %v447
      %449 = vmatmul.bf16.gmra.mxu0 %v345
      %v450 = vpop.f32.mrf.mxu0
      %v451 = vadd.f32 %v275, %v450
      %v452 = vpop.f32.mrf.mxu0
      %v453 = vadd.f32 %v275, %v452
      %454 = vmatmul.bf16.gmra.mxu0 %v346
      %v455 = vpop.f32.mrf.mxu0
      %v456 = vadd.f32 %v275, %v455
      %v457 = vpop.f32.mrf.mxu0
      %v458 = vadd.f32 %v275, %v457
      %459 = vmatmul.bf16.gmra.mxu0 %v347
      %v460 = vpop.f32.mrf.mxu0
      %v461 = vadd.f32 %v275, %v460
      %v462 = vpop.f32.mrf.mxu0
      %v463 = vadd.f32 %v275, %v462
      %464 = vmatmul.bf16.gmra.mxu0 %v348
      %v465 = vpop.f32.mrf.mxu0
      %v466 = vadd.f32 %v275, %v465
      %v467 = vpop.f32.mrf.mxu0
      %v468 = vadd.f32 %v275, %v467
      %469 = vmatmul.bf16.gmra.mxu0 %v349
      %v470 = vpop.f32.mrf.mxu0
      %v471 = vadd.f32 %v275, %v470
      %v472 = vpop.f32.mrf.mxu0
      %v473 = vadd.f32 %v275, %v472
      %474 = vmatmul.bf16.gmra.mxu0 %v350
      %v475 = vpop.f32.mrf.mxu0
      %v476 = vadd.f32 %v275, %v475
      %v477 = vpop.f32.mrf.mxu0
      %v478 = vadd.f32 %v275, %v477
      %479 = vmatmul.bf16.gmra.mxu0 %v351
      %v480 = vpop.f32.mrf.mxu0
      %v481 = vadd.f32 %v275, %v480
      %v482 = vpop.f32.mrf.mxu0
      %v483 = vadd.f32 %v275, %v482
      %484 = vmatmul.bf16.gmra.mxu0 %v352
      %v485 = vpop.f32.mrf.mxu0
      %v486 = vadd.f32 %v275, %v485
      %v487 = vpop.f32.mrf.mxu0
      %v488 = vadd.f32 %v275, %v487
      %489 = vmatmul.bf16.gmra.mxu0 %v353
      %v490 = vpop.f32.mrf.mxu0
      %v491 = vadd.f32 %v275, %v490
      %v492 = vpop.f32.mrf.mxu0
      %v493 = vadd.f32 %v275, %v492
      %494 = vmatmul.bf16.gmra.mxu0 %v354
      %v495 = vpop.f32.mrf.mxu0
      %v496 = vadd.f32 %v275, %v495
      %v497 = vpop.f32.mrf.mxu0
      %v498 = vadd.f32 %v275, %v497
      %499 = vmatmul.bf16.gmra.mxu0 %v355
      %v500 = vpop.f32.mrf.mxu0
      %v501 = vadd.f32 %v275, %v500
      %v502 = vpop.f32.mrf.mxu0
      %v503 = vadd.f32 %v275, %v502
      %504 = vmatmul.bf16.gmra.mxu0 %v356
      %v505 = vpop.f32.mrf.mxu0
      %v506 = vadd.f32 %v275, %v505
      %v507 = vpop.f32.mrf.mxu0
      %v508 = vadd.f32 %v275, %v507
      %509 = vdwg.mxu0
      %v510 = vmax.f32 %v431, 0.0
      %v511 = vmax.f32 %v433, 0.0
      %v512 = vmax.f32 %v436, 0.0
      %v513 = vmax.f32 %v438, 0.0
      %v514 = vmax.f32 %v441, 0.0
      %v515 = vmax.f32 %v443, 0.0
      %v516 = vmax.f32 %v446, 0.0
      %v517 = vmax.f32 %v448, 0.0
      %v518 = vmax.f32 %v451, 0.0
      %v519 = vmax.f32 %v453, 0.0
      %v520 = vmax.f32 %v456, 0.0
      %v521 = vmax.f32 %v458, 0.0
      %v522 = vmax.f32 %v461, 0.0
      %v523 = vmax.f32 %v463, 0.0
      %v524 = vmax.f32 %v466, 0.0
      %v525 = vmax.f32 %v468, 0.0
      %v526 = vmax.f32 %v471, 0.0
      %v527 = vmax.f32 %v473, 0.0
      %v528 = vmax.f32 %v476, 0.0
      %v529 = vmax.f32 %v478, 0.0
      %v530 = vmax.f32 %v481, 0.0
      %v531 = vmax.f32 %v483, 0.0
      %v532 = vmax.f32 %v486, 0.0
      %v533 = vmax.f32 %v488, 0.0
      %v534 = vmax.f32 %v491, 0.0
      %v535 = vmax.f32 %v493, 0.0
      %v536 = vmax.f32 %v496, 0.0
      %v537 = vmax.f32 %v498, 0.0
      %v538 = vmax.f32 %v501, 0.0
      %v539 = vmax.f32 %v503, 0.0
      %v540 = vmax.f32 %v506, 0.0
      %v541 = vmax.f32 %v508, 0.0
      %542 = vst [vmem:[#allocation2] sm:$0xff] 0.0
      %543 = vst [vmem:[#allocation2 + $0x8] sm:$0xff] 0.0
      %544 = vst [vmem:[#allocation2 + $0x10] sm:$0x3] 0.0
      %545 = vst [vmem:[#allocation2 + $0x18] sm:$0xff] 0.0
      %546 = vst [vmem:[#allocation2 + $0x20] sm:$0xff] 0.0
      %547 = vst [vmem:[#allocation2 + $0x28] sm:$0x3] 0.0
      %548 = vst [vmem:[#allocation2 + $0x30] sm:$0xff] 0.0
      %549 = vst [vmem:[#allocation2 + $0x38] sm:$0xff] 0.0
      %550 = vst [vmem:[#allocation2 + $0x40] sm:$0x3] 0.0
      %551 = vst [vmem:[#allocation2 + $0x48] sm:$0xff] 0.0
      %552 = vst [vmem:[#allocation2 + $0x50] sm:$0xff] 0.0
      %553 = vst [vmem:[#allocation2 + $0x58] sm:$0x3] 0.0
      %554 = vst [vmem:[#allocation2 + $0x60] sm:$0xff] 0.0
      %555 = vst [vmem:[#allocation2 + $0x68] sm:$0xff] 0.0
      %556 = vst [vmem:[#allocation2 + $0x70] sm:$0x3] 0.0
      %557 = vst [vmem:[#allocation2 + $0x78] sm:$0xff] 0.0
      %558 = vst [vmem:[#allocation2 + $0x80] sm:$0xff] 0.0
      %559 = vst [vmem:[#allocation2 + $0x88] sm:$0x3] 0.0
      %560 = vst [vmem:[#allocation2 + $0x90] sm:$0xff] 0.0
      %561 = vst [vmem:[#allocation2 + $0x98] sm:$0xff] 0.0
      %562 = vst [vmem:[#allocation2 + $0xa0] sm:$0x3] 0.0
      %563 = vst [vmem:[#allocation2 + $0xa8] sm:$0xff] 0.0
      %564 = vst [vmem:[#allocation2 + $0xb0] sm:$0xff] 0.0
      %565 = vst [vmem:[#allocation2 + $0xb8] sm:$0x3] 0.0
      %566 = vst [vmem:[#allocation2 + $0xc0] sm:$0xff] 0.0
      %567 = vst [vmem:[#allocation2 + $0xc8] sm:$0xff] 0.0
      %568 = vst [vmem:[#allocation2 + $0xd0] sm:$0x3] 0.0
      %569 = vst [vmem:[#allocation2 + $0xd8] sm:$0xff] 0.0
      %570 = vst [vmem:[#allocation2 + $0xe0] sm:$0xff] 0.0
      %571 = vst [vmem:[#allocation2 + $0xe8] sm:$0x3] 0.0
      %572 = vst [vmem:[#allocation2 + $0xf0] sm:$0xff] 0.0
      %573 = vst [vmem:[#allocation2 + $0xf8] sm:$0xff] 0.0
      %574 = vst [vmem:[#allocation2 + $0x100] sm:$0x3] 0.0
      %575 = vst [vmem:[#allocation2 + $0x108] sm:$0xff] 0.0
      %576 = vst [vmem:[#allocation2 + $0x110] sm:$0xff] 0.0
      %577 = vst [vmem:[#allocation2 + $0x118] sm:$0x3] 0.0
      %578 = vst [vmem:[#allocation2 + $0x120] sm:$0xff] 0.0
      %579 = vst [vmem:[#allocation2 + $0x128] sm:$0xff] 0.0
      %580 = vst [vmem:[#allocation2 + $0x130] sm:$0x3] 0.0
      %581 = vst [vmem:[#allocation2 + $0x138] sm:$0xff] 0.0
      %582 = vst [vmem:[#allocation2 + $0x140] sm:$0xff] 0.0
      %583 = vst [vmem:[#allocation2 + $0x148] sm:$0x3] 0.0
      %584 = vst [vmem:[#allocation2 + $0x150] sm:$0xff] 0.0
      %585 = vst [vmem:[#allocation2 + $0x158] sm:$0xff] 0.0
      %586 = vst [vmem:[#allocation2 + $0x160] sm:$0x3] 0.0
      %587 = vst [vmem:[#allocation2 + $0x168] sm:$0xff] 0.0
      %588 = vst [vmem:[#allocation2 + $0x170] sm:$0xff] 0.0
      %589 = vst [vmem:[#allocation2 + $0x178] sm:$0x3] 0.0
      %590 = vst [vmem:[#allocation2 + $0x180] sm:$0xff] 0.0
      %591 = vst [vmem:[#allocation2 + $0x188] sm:$0xff] 0.0
      %592 = vst [vmem:[#allocation2 + $0x190] sm:$0x3] 0.0
      %593 = vst [vmem:[#allocation2 + $0x198] sm:$0xff] 0.0
      %594 = vst [vmem:[#allocation2 + $0x1a0] sm:$0xff] 0.0
      %595 = vst [vmem:[#allocation2 + $0x1a8] sm:$0x3] 0.0
      %s596 = scalar_lea.vmem [#allocation2], 24
      %597 = vst [vmem:[%s596 + $0x1] sm:$0xff] %v510
      %598 = vst [vmem:[%s596 + $0x9] sm:$0xff] %v511
      %599 = vst [vmem:[%s596 + $0x19] sm:$0xff] %v512
      %600 = vst [vmem:[%s596 + $0x21] sm:$0xff] %v513
      %601 = vst [vmem:[%s596 + $0x31] sm:$0xff] %v514
      %602 = vst [vmem:[%s596 + $0x39] sm:$0xff] %v515
      %603 = vst [vmem:[%s596 + $0x49] sm:$0xff] %v516
      %604 = vst [vmem:[%s596 + $0x51] sm:$0xff] %v517
      %605 = vst [vmem:[%s596 + $0x61] sm:$0xff] %v518
      %606 = vst [vmem:[%s596 + $0x69] sm:$0xff] %v519
      %607 = vst [vmem:[%s596 + $0x79] sm:$0xff] %v520
      %608 = vst [vmem:[%s596 + $0x81] sm:$0xff] %v521
      %609 = vst [vmem:[%s596 + $0x91] sm:$0xff] %v522
      %610 = vst [vmem:[%s596 + $0x99] sm:$0xff] %v523
      %611 = vst [vmem:[%s596 + $0xa9] sm:$0xff] %v524
      %612 = vst [vmem:[%s596 + $0xb1] sm:$0xff] %v525
      %613 = vst [vmem:[%s596 + $0xc1] sm:$0xff] %v526
      %614 = vst [vmem:[%s596 + $0xc9] sm:$0xff] %v527
      %615 = vst [vmem:[%s596 + $0xd9] sm:$0xff] %v528
      %616 = vst [vmem:[%s596 + $0xe1] sm:$0xff] %v529
      %617 = vst [vmem:[%s596 + $0xf1] sm:$0xff] %v530
      %618 = vst [vmem:[%s596 + $0xf9] sm:$0xff] %v531
      %619 = vst [vmem:[%s596 + $0x109] sm:$0xff] %v532
      %620 = vst [vmem:[%s596 + $0x111] sm:$0xff] %v533
      %621 = vst [vmem:[%s596 + $0x121] sm:$0xff] %v534
      %622 = vst [vmem:[%s596 + $0x129] sm:$0xff] %v535
      %623 = vst [vmem:[%s596 + $0x139] sm:$0xff] %v536
      %624 = vst [vmem:[%s596 + $0x141] sm:$0xff] %v537
      %625 = vst [vmem:[%s596 + $0x151] sm:$0xff] %v538
      %626 = vst [vmem:[%s596 + $0x159] sm:$0xff] %v539
      %627 = vst [vmem:[%s596 + $0x169] sm:$0xff] %v540
      %628 = vst [vmem:[%s596 + $0x171] sm:$0xff] %v541
      %v629 = vld [vmem:[#allocation2] sm:$0xff]
      %v630 = vld [vmem:[#allocation2 + $0x8] sm:$0xff]
      %v631 = vld [vmem:[#allocation2 + $0x18] sm:$0xff]
      %v632 = vld [vmem:[#allocation2 + $0x20] sm:$0xff]
      %v633 = vld [vmem:[#allocation2 + $0x30] sm:$0xff]
      %v634 = vld [vmem:[#allocation2 + $0x38] sm:$0xff]
      %v635 = vld [vmem:[#allocation2 + $0x48] sm:$0xff]
      %v636 = vld [vmem:[#allocation2 + $0x50] sm:$0xff]
      %v637 = vld [vmem:[#allocation2 + $0x60] sm:$0xff]
      %v638 = vld [vmem:[#allocation2 + $0x68] sm:$0xff]
      %v639 = vld [vmem:[#allocation2 + $0x78] sm:$0xff]
      %v640 = vld [vmem:[#allocation2 + $0x80] sm:$0xff]
      %v641 = vld [vmem:[#allocation2 + $0x90] sm:$0xff]
      %v642 = vld [vmem:[#allocation2 + $0x98] sm:$0xff]
      %v643 = vld [vmem:[#allocation2 + $0xa8] sm:$0xff]
      %v644 = vld [vmem:[#allocation2 + $0xb0] sm:$0xff]
      %v645 = vld [vmem:[#allocation2 + $0xc0] sm:$0xff]
      %v646 = vld [vmem:[#allocation2 + $0xc8] sm:$0xff]
      %v647 = vld [vmem:[#allocation2 + $0xd8] sm:$0xff]
      %v648 = vld [vmem:[#allocation2 + $0xe0] sm:$0xff]
      %v649 = vld [vmem:[#allocation2 + $0xf0] sm:$0xff]
      %v650 = vld [vmem:[#allocation2 + $0xf8] sm:$0xff]
      %v651 = vld [vmem:[#allocation2 + $0x108] sm:$0xff]
      %v652 = vld [vmem:[#allocation2 + $0x110] sm:$0xff]
      %v653 = vld [vmem:[#allocation2 + $0x120] sm:$0xff]
      %v654 = vld [vmem:[#allocation2 + $0x128] sm:$0xff]
      %v655 = vld [vmem:[#allocation2 + $0x138] sm:$0xff]
      %v656 = vld [vmem:[#allocation2 + $0x140] sm:$0xff]
      %v657 = vld [vmem:[#allocation2 + $0x150] sm:$0xff]
      %v658 = vld [vmem:[#allocation2 + $0x158] sm:$0xff]
      %v659 = vld [vmem:[#allocation2 + $0x168] sm:$0xff]
      %v660 = vld [vmem:[#allocation2 + $0x170] sm:$0xff]
      %v661 = vpack.c.bf16 %v630, %v629
      %v662 = vpack.c.bf16 %v632, %v631
      %v663 = vpack.c.bf16 %v634, %v633
      %v664 = vpack.c.bf16 %v636, %v635
      %v665 = vpack.c.bf16 %v638, %v637
      %v666 = vpack.c.bf16 %v640, %v639
      %v667 = vpack.c.bf16 %v642, %v641
      %v668 = vpack.c.bf16 %v644, %v643
      %v669 = vpack.c.bf16 %v646, %v645
      %v670 = vpack.c.bf16 %v648, %v647
      %v671 = vpack.c.bf16 %v650, %v649
      %v672 = vpack.c.bf16 %v652, %v651
      %v673 = vpack.c.bf16 %v654, %v653
      %v674 = vpack.c.bf16 %v656, %v655
      %v675 = vpack.c.bf16 %v658, %v657
      %v676 = vpack.c.bf16 %v660, %v659
      %v677 = vld [vmem:[%s3] sm:$0xf]
      %v678 = vld [vmem:[%s3 + $0x4] sm:$0xf]
      %v679 = vld [vmem:[%s3 + $0x8] sm:$0xf]
      %v680 = vld [vmem:[%s3 + $0xc] sm:$0xf]
      %v681 = vld [vmem:[%s3 + $0x10] sm:$0xf]
      %v682 = vld [vmem:[%s3 + $0x14] sm:$0xf]
      %v683 = vld [vmem:[%s3 + $0x18] sm:$0xf]
      %v684 = vld [vmem:[%s3 + $0x1c] sm:$0xf]
      %v685 = vld [vmem:[%s3 + $0x20] sm:$0xf]
      %v686 = vld [vmem:[%s3 + $0x24] sm:$0xf]
      %v687 = vld [vmem:[%s3 + $0x28] sm:$0xf]
      %v688 = vld [vmem:[%s3 + $0x2c] sm:$0xf]
      %v689 = vld [vmem:[%s3 + $0x30] sm:$0xf]
      %v690 = vld [vmem:[%s3 + $0x34] sm:$0xf]
      %v691 = vld [vmem:[%s3 + $0x38] sm:$0xf]
      %v692 = vld [vmem:[%s3 + $0x3c] sm:$0xf]
      %v693 = vld [vmem:[#allocation2 + $0x1] sm:$0xff]
      %v694 = vld [vmem:[#allocation2 + $0x9] sm:$0xff]
      %v695 = vld [vmem:[#allocation2 + $0x19] sm:$0xff]
      %v696 = vld [vmem:[#allocation2 + $0x21] sm:$0xff]
      %v697 = vld [vmem:[#allocation2 + $0x31] sm:$0xff]
      %v698 = vld [vmem:[#allocation2 + $0x39] sm:$0xff]
      %v699 = vld [vmem:[#allocation2 + $0x49] sm:$0xff]
      %v700 = vld [vmem:[#allocation2 + $0x51] sm:$0xff]
      %v701 = vld [vmem:[#allocation2 + $0x61] sm:$0xff]
      %v702 = vld [vmem:[#allocation2 + $0x69] sm:$0xff]
      %v703 = vld [vmem:[#allocation2 + $0x79] sm:$0xff]
      %v704 = vld [vmem:[#allocation2 + $0x81] sm:$0xff]
      %v705 = vld [vmem:[#allocation2 + $0x91] sm:$0xff]
      %v706 = vld [vmem:[#allocation2 + $0x99] sm:$0xff]
      %v707 = vld [vmem:[#allocation2 + $0xa9] sm:$0xff]
      %v708 = vld [vmem:[#allocation2 + $0xb1] sm:$0xff]
      %v709 = vld [vmem:[#allocation2 + $0xc1] sm:$0xff]
      %v710 = vld [vmem:[#allocation2 + $0xc9] sm:$0xff]
      %v711 = vld [vmem:[#allocation2 + $0xd9] sm:$0xff]
      %v712 = vld [vmem:[#allocation2 + $0xe1] sm:$0xff]
      %v713 = vld [vmem:[#allocation2 + $0xf1] sm:$0xff]
      %v714 = vld [vmem:[#allocation2 + $0xf9] sm:$0xff]
      %v715 = vld [vmem:[#allocation2 + $0x109] sm:$0xff]
      %v716 = vld [vmem:[#allocation2 + $0x111] sm:$0xff]
      %v717 = vld [vmem:[#allocation2 + $0x121] sm:$0xff]
      %v718 = vld [vmem:[#allocation2 + $0x129] sm:$0xff]
      %v719 = vld [vmem:[#allocation2 + $0x139] sm:$0xff]
      %v720 = vld [vmem:[#allocation2 + $0x141] sm:$0xff]
      %v721 = vld [vmem:[#allocation2 + $0x151] sm:$0xff]
      %v722 = vld [vmem:[#allocation2 + $0x159] sm:$0xff]
      %v723 = vld [vmem:[#allocation2 + $0x169] sm:$0xff]
      %v724 = vld [vmem:[#allocation2 + $0x171] sm:$0xff]
      %v725 = vpack.c.bf16 %v694, %v693
      %v726 = vpack.c.bf16 %v696, %v695
      %v727 = vpack.c.bf16 %v698, %v697
      %v728 = vpack.c.bf16 %v700, %v699
      %v729 = vpack.c.bf16 %v702, %v701
      %v730 = vpack.c.bf16 %v704, %v703
      %v731 = vpack.c.bf16 %v706, %v705
      %v732 = vpack.c.bf16 %v708, %v707
      %v733 = vpack.c.bf16 %v710, %v709
      %v734 = vpack.c.bf16 %v712, %v711
      %v735 = vpack.c.bf16 %v714, %v713
      %v736 = vpack.c.bf16 %v716, %v715
      %v737 = vpack.c.bf16 %v718, %v717
      %v738 = vpack.c.bf16 %v720, %v719
      %v739 = vpack.c.bf16 %v722, %v721
      %v740 = vpack.c.bf16 %v724, %v723
      %s741 = scalar_lea.vmem %s3, 64
      %v742 = vld [vmem:[%s741] sm:$0xf]
      %v743 = vld [vmem:[%s741 + $0x4] sm:$0xf]
      %v744 = vld [vmem:[%s741 + $0x8] sm:$0xf]
      %v745 = vld [vmem:[%s741 + $0xc] sm:$0xf]
      %v746 = vld [vmem:[%s741 + $0x10] sm:$0xf]
      %v747 = vld [vmem:[%s741 + $0x14] sm:$0xf]
      %v748 = vld [vmem:[%s741 + $0x18] sm:$0xf]
      %v749 = vld [vmem:[%s741 + $0x1c] sm:$0xf]
      %v750 = vld [vmem:[%s741 + $0x20] sm:$0xf]
      %v751 = vld [vmem:[%s741 + $0x24] sm:$0xf]
      %v752 = vld [vmem:[%s741 + $0x28] sm:$0xf]
      %v753 = vld [vmem:[%s741 + $0x2c] sm:$0xf]
      %v754 = vld [vmem:[%s741 + $0x30] sm:$0xf]
      %v755 = vld [vmem:[%s741 + $0x34] sm:$0xf]
      %v756 = vld [vmem:[%s741 + $0x38] sm:$0xf]
      %v757 = vld [vmem:[%s741 + $0x3c] sm:$0xf]
      %v774 = vunpack.c.l.b16 %v742
      %v775 = vunpack.c.l.b16 %v743
      %v776 = vunpack.c.l.b16 %v744
      %v777 = vunpack.c.l.b16 %v745
      %v778 = vunpack.c.l.b16 %v746
      %v779 = vunpack.c.l.b16 %v747
      %v780 = vunpack.c.l.b16 %v748
      %v781 = vunpack.c.l.b16 %v749
      %v782 = vunpack.c.l.b16 %v750
      %v783 = vunpack.c.l.b16 %v751
      %v784 = vunpack.c.l.b16 %v752
      %v785 = vunpack.c.l.b16 %v753
      %v786 = vunpack.c.l.b16 %v754
      %v787 = vunpack.c.l.b16 %v755
      %v788 = vunpack.c.l.b16 %v756
      %v789 = vunpack.c.l.b16 %v757
      %v790 = vpack.c.b16 %v775, %v774
      %v791 = vpack.c.b16 %v777, %v776
      %v792 = vpack.c.b16 %v779, %v778
      %v793 = vpack.c.b16 %v781, %v780
      %v794 = vpack.c.b16 %v783, %v782
      %v795 = vpack.c.b16 %v785, %v784
      %v796 = vpack.c.b16 %v787, %v786
      %v797 = vpack.c.b16 %v789, %v788
      %806 = vmatpush.bf16.msra.mxu0 %v797
      %807 = vmatpush.bf16.msra.mxu0 %v796
      %808 = vmatpush.bf16.msra.mxu0 %v795
      %809 = vmatpush.bf16.msra.mxu0 %v794
      %810 = vmatpush.bf16.msra.mxu0 %v793
      %811 = vmatpush.bf16.msra.mxu0 %v792
      %812 = vmatpush.bf16.msra.mxu0 %v791
      %813 = vmatpush.bf16.msra.mxu0 %v790
      %814 = vmatmul.bf16.gmra.mxu0 %v725
      %v815 = vpop.f32.mrf.mxu0
      %v816 = vadd.f32 0.0, %v815
      %v817 = vpop.f32.mrf.mxu0
      %v818 = vadd.f32 0.0, %v817
      %819 = vmatmul.bf16.gmra.mxu0 %v726
      %v820 = vpop.f32.mrf.mxu0
      %v821 = vadd.f32 0.0, %v820
      %v822 = vpop.f32.mrf.mxu0
      %v823 = vadd.f32 0.0, %v822
      %824 = vmatmul.bf16.gmra.mxu0 %v727
      %v825 = vpop.f32.mrf.mxu0
      %v826 = vadd.f32 0.0, %v825
      %v827 = vpop.f32.mrf.mxu0
      %v828 = vadd.f32 0.0, %v827
      %829 = vmatmul.bf16.gmra.mxu0 %v728
      %v830 = vpop.f32.mrf.mxu0
      %v831 = vadd.f32 0.0, %v830
      %v832 = vpop.f32.mrf.mxu0
      %v833 = vadd.f32 0.0, %v832
      %834 = vmatmul.bf16.gmra.mxu0 %v729
      %v835 = vpop.f32.mrf.mxu0
      %v836 = vadd.f32 0.0, %v835
      %v837 = vpop.f32.mrf.mxu0
      %v838 = vadd.f32 0.0, %v837
      %839 = vmatmul.bf16.gmra.mxu0 %v730
      %v840 = vpop.f32.mrf.mxu0
      %v841 = vadd.f32 0.0, %v840
      %v842 = vpop.f32.mrf.mxu0
      %v843 = vadd.f32 0.0, %v842
      %844 = vmatmul.bf16.gmra.mxu0 %v731
      %v845 = vpop.f32.mrf.mxu0
      %v846 = vadd.f32 0.0, %v845
      %v847 = vpop.f32.mrf.mxu0
      %v848 = vadd.f32 0.0, %v847
      %849 = vmatmul.bf16.gmra.mxu0 %v732
      %v850 = vpop.f32.mrf.mxu0
      %v851 = vadd.f32 0.0, %v850
      %v852 = vpop.f32.mrf.mxu0
      %v853 = vadd.f32 0.0, %v852
      %854 = vmatmul.bf16.gmra.mxu0 %v733
      %v855 = vpop.f32.mrf.mxu0
      %v856 = vadd.f32 0.0, %v855
      %v857 = vpop.f32.mrf.mxu0
      %v858 = vadd.f32 0.0, %v857
      %859 = vmatmul.bf16.gmra.mxu0 %v734
      %v860 = vpop.f32.mrf.mxu0
      %v861 = vadd.f32 0.0, %v860
      %v862 = vpop.f32.mrf.mxu0
      %v863 = vadd.f32 0.0, %v862
      %864 = vmatmul.bf16.gmra.mxu0 %v735
      %v865 = vpop.f32.mrf.mxu0
      %v866 = vadd.f32 0.0, %v865
      %v867 = vpop.f32.mrf.mxu0
      %v868 = vadd.f32 0.0, %v867
      %869 = vmatmul.bf16.gmra.mxu0 %v736
      %v870 = vpop.f32.mrf.mxu0
      %v871 = vadd.f32 0.0, %v870
      %v872 = vpop.f32.mrf.mxu0
      %v873 = vadd.f32 0.0, %v872
      %874 = vmatmul.bf16.gmra.mxu0 %v737
      %v875 = vpop.f32.mrf.mxu0
      %v876 = vadd.f32 0.0, %v875
      %v877 = vpop.f32.mrf.mxu0
      %v878 = vadd.f32 0.0, %v877
      %879 = vmatmul.bf16.gmra.mxu0 %v738
      %v880 = vpop.f32.mrf.mxu0
      %v881 = vadd.f32 0.0, %v880
      %v882 = vpop.f32.mrf.mxu0
      %v883 = vadd.f32 0.0, %v882
      %884 = vmatmul.bf16.gmra.mxu0 %v739
      %v885 = vpop.f32.mrf.mxu0
      %v886 = vadd.f32 0.0, %v885
      %v887 = vpop.f32.mrf.mxu0
      %v888 = vadd.f32 0.0, %v887
      %889 = vmatmul.bf16.gmra.mxu0 %v740
      %v890 = vpop.f32.mrf.mxu0
      %v891 = vadd.f32 0.0, %v890
      %v892 = vpop.f32.mrf.mxu0
      %v893 = vadd.f32 0.0, %v892
      %894 = vdwg.mxu0
      %v911 = vunpack.c.l.b16 %v677
      %v912 = vunpack.c.l.b16 %v678
      %v913 = vunpack.c.l.b16 %v679
      %v914 = vunpack.c.l.b16 %v680
      %v915 = vunpack.c.l.b16 %v681
      %v916 = vunpack.c.l.b16 %v682
      %v917 = vunpack.c.l.b16 %v683
      %v918 = vunpack.c.l.b16 %v684
      %v919 = vunpack.c.l.b16 %v685
      %v920 = vunpack.c.l.b16 %v686
      %v921 = vunpack.c.l.b16 %v687
      %v922 = vunpack.c.l.b16 %v688
      %v923 = vunpack.c.l.b16 %v689
      %v924 = vunpack.c.l.b16 %v690
      %v925 = vunpack.c.l.b16 %v691
      %v926 = vunpack.c.l.b16 %v692
      %v927 = vpack.c.b16 %v912, %v911
      %v928 = vpack.c.b16 %v914, %v913
      %v929 = vpack.c.b16 %v916, %v915
      %v930 = vpack.c.b16 %v918, %v917
      %v931 = vpack.c.b16 %v920, %v919
      %v932 = vpack.c.b16 %v922, %v921
      %v933 = vpack.c.b16 %v924, %v923
      %v934 = vpack.c.b16 %v926, %v925
      %943 = vmatpush.bf16.msra.mxu0 %v934
      %944 = vmatpush.bf16.msra.mxu0 %v933
      %945 = vmatpush.bf16.msra.mxu0 %v932
      %946 = vmatpush.bf16.msra.mxu0 %v931
      %947 = vmatpush.bf16.msra.mxu0 %v930
      %948 = vmatpush.bf16.msra.mxu0 %v929
      %949 = vmatpush.bf16.msra.mxu0 %v928
      %950 = vmatpush.bf16.msra.mxu0 %v927
      %951 = vmatmul.bf16.gmra.mxu0 %v661
      %v952 = vpop.f32.mrf.mxu0
      %v953 = vadd.f32 %v816, %v952
      %v954 = vpop.f32.mrf.mxu0
      %v955 = vadd.f32 %v818, %v954
      %956 = vmatmul.bf16.gmra.mxu0 %v662
      %v957 = vpop.f32.mrf.mxu0
      %v958 = vadd.f32 %v821, %v957
      %v959 = vpop.f32.mrf.mxu0
      %v960 = vadd.f32 %v823, %v959
      %961 = vmatmul.bf16.gmra.mxu0 %v663
      %v962 = vpop.f32.mrf.mxu0
      %v963 = vadd.f32 %v826, %v962
      %v964 = vpop.f32.mrf.mxu0
      %v965 = vadd.f32 %v828, %v964
      %966 = vmatmul.bf16.gmra.mxu0 %v664
      %v967 = vpop.f32.mrf.mxu0
      %v968 = vadd.f32 %v831, %v967
      %v969 = vpop.f32.mrf.mxu0
      %v970 = vadd.f32 %v833, %v969
      %971 = vmatmul.bf16.gmra.mxu0 %v665
      %v972 = vpop.f32.mrf.mxu0
      %v973 = vadd.f32 %v836, %v972
      %v974 = vpop.f32.mrf.mxu0
      %v975 = vadd.f32 %v838, %v974
      %976 = vmatmul.bf16.gmra.mxu0 %v666
      %v977 = vpop.f32.mrf.mxu0
      %v978 = vadd.f32 %v841, %v977
      %v979 = vpop.f32.mrf.mxu0
      %v980 = vadd.f32 %v843, %v979
      %981 = vmatmul.bf16.gmra.mxu0 %v667
      %v982 = vpop.f32.mrf.mxu0
      %v983 = vadd.f32 %v846, %v982
      %v984 = vpop.f32.mrf.mxu0
      %v985 = vadd.f32 %v848, %v984
      %986 = vmatmul.bf16.gmra.mxu0 %v668
      %v987 = vpop.f32.mrf.mxu0
      %v988 = vadd.f32 %v851, %v987
      %v989 = vpop.f32.mrf.mxu0
      %v990 = vadd.f32 %v853, %v989
      %991 = vmatmul.bf16.gmra.mxu0 %v669
      %v992 = vpop.f32.mrf.mxu0
      %v993 = vadd.f32 %v856, %v992
      %v994 = vpop.f32.mrf.mxu0
      %v995 = vadd.f32 %v858, %v994
      %996 = vmatmul.bf16.gmra.mxu0 %v670
      %v997 = vpop.f32.mrf.mxu0
      %v998 = vadd.f32 %v861, %v997
      %v999 = vpop.f32.mrf.mxu0
      %v1000 = vadd.f32 %v863, %v999
      %1001 = vmatmul.bf16.gmra.mxu0 %v671
      %v1002 = vpop.f32.mrf.mxu0
      %v1003 = vadd.f32 %v866, %v1002
      %v1004 = vpop.f32.mrf.mxu0
      %v1005 = vadd.f32 %v868, %v1004
      %1006 = vmatmul.bf16.gmra.mxu0 %v672
      %v1007 = vpop.f32.mrf.mxu0
      %v1008 = vadd.f32 %v871, %v1007
      %v1009 = vpop.f32.mrf.mxu0
      %v1010 = vadd.f32 %v873, %v1009
      %1011 = vmatmul.bf16.gmra.mxu0 %v673
      %v1012 = vpop.f32.mrf.mxu0
      %v1013 = vadd.f32 %v876, %v1012
      %v1014 = vpop.f32.mrf.mxu0
      %v1015 = vadd.f32 %v878, %v1014
      %1016 = vmatmul.bf16.gmra.mxu0 %v674
      %v1017 = vpop.f32.mrf.mxu0
      %v1018 = vadd.f32 %v881, %v1017
      %v1019 = vpop.f32.mrf.mxu0
      %v1020 = vadd.f32 %v883, %v1019
      %1021 = vmatmul.bf16.gmra.mxu0 %v675
      %v1022 = vpop.f32.mrf.mxu0
      %v1023 = vadd.f32 %v886, %v1022
      %v1024 = vpop.f32.mrf.mxu0
      %v1025 = vadd.f32 %v888, %v1024
      %1026 = vmatmul.bf16.gmra.mxu0 %v676
      %v1027 = vpop.f32.mrf.mxu0
      %v1028 = vadd.f32 %v891, %v1027
      %v1029 = vpop.f32.mrf.mxu0
      %v1030 = vadd.f32 %v893, %v1029
      %1031 = vdwg.mxu0
      %v1032 = vld [vmem:[#allocation2 + $0x2] sm:$0xff]
      %v1033 = vld [vmem:[#allocation2 + $0xa] sm:$0xff]
      %v1034 = vld [vmem:[#allocation2 + $0x1a] sm:$0xff]
      %v1035 = vld [vmem:[#allocation2 + $0x22] sm:$0xff]
      %v1036 = vld [vmem:[#allocation2 + $0x32] sm:$0xff]
      %v1037 = vld [vmem:[#allocation2 + $0x3a] sm:$0xff]
      %v1038 = vld [vmem:[#allocation2 + $0x4a] sm:$0xff]
      %v1039 = vld [vmem:[#allocation2 + $0x52] sm:$0xff]
      %v1040 = vld [vmem:[#allocation2 + $0x62] sm:$0xff]
      %v1041 = vld [vmem:[#allocation2 + $0x6a] sm:$0xff]
      %v1042 = vld [vmem:[#allocation2 + $0x7a] sm:$0xff]
      %v1043 = vld [vmem:[#allocation2 + $0x82] sm:$0xff]
      %v1044 = vld [vmem:[#allocation2 + $0x92] sm:$0xff]
      %v1045 = vld [vmem:[#allocation2 + $0x9a] sm:$0xff]
      %v1046 = vld [vmem:[#allocation2 + $0xaa] sm:$0xff]
      %v1047 = vld [vmem:[#allocation2 + $0xb2] sm:$0xff]
      %v1048 = vld [vmem:[#allocation2 + $0xc2] sm:$0xff]
      %v1049 = vld [vmem:[#allocation2 + $0xca] sm:$0xff]
      %v1050 = vld [vmem:[#allocation2 + $0xda] sm:$0xff]
      %v1051 = vld [vmem:[#allocation2 + $0xe2] sm:$0xff]
      %v1052 = vld [vmem:[#allocation2 + $0xf2] sm:$0xff]
      %v1053 = vld [vmem:[#allocation2 + $0xfa] sm:$0xff]
      %v1054 = vld [vmem:[#allocation2 + $0x10a] sm:$0xff]
      %v1055 = vld [vmem:[#allocation2 + $0x112] sm:$0xff]
      %v1056 = vld [vmem:[#allocation2 + $0x122] sm:$0xff]
      %v1057 = vld [vmem:[#allocation2 + $0x12a] sm:$0xff]
      %v1058 = vld [vmem:[#allocation2 + $0x13a] sm:$0xff]
      %v1059 = vld [vmem:[#allocation2 + $0x142] sm:$0xff]
      %v1060 = vld [vmem:[#allocation2 + $0x152] sm:$0xff]
      %v1061 = vld [vmem:[#allocation2 + $0x15a] sm:$0xff]
      %v1062 = vld [vmem:[#allocation2 + $0x16a] sm:$0xff]
      %v1063 = vld [vmem:[#allocation2 + $0x172] sm:$0xff]
      %v1064 = vpack.c.bf16 %v1033, %v1032
      %v1065 = vpack.c.bf16 %v1035, %v1034
      %v1066 = vpack.c.bf16 %v1037, %v1036
      %v1067 = vpack.c.bf16 %v1039, %v1038
      %v1068 = vpack.c.bf16 %v1041, %v1040
      %v1069 = vpack.c.bf16 %v1043, %v1042
      %v1070 = vpack.c.bf16 %v1045, %v1044
      %v1071 = vpack.c.bf16 %v1047, %v1046
      %v1072 = vpack.c.bf16 %v1049, %v1048
      %v1073 = vpack.c.bf16 %v1051, %v1050
      %v1074 = vpack.c.bf16 %v1053, %v1052
      %v1075 = vpack.c.bf16 %v1055, %v1054
      %v1076 = vpack.c.bf16 %v1057, %v1056
      %v1077 = vpack.c.bf16 %v1059, %v1058
      %v1078 = vpack.c.bf16 %v1061, %v1060
      %v1079 = vpack.c.bf16 %v1063, %v1062
      %s1080 = scalar_lea.vmem %s3, 128
      %v1081 = vld [vmem:[%s1080] sm:$0xf]
      %v1082 = vld [vmem:[%s1080 + $0x4] sm:$0xf]
      %v1083 = vld [vmem:[%s1080 + $0x8] sm:$0xf]
      %v1084 = vld [vmem:[%s1080 + $0xc] sm:$0xf]
      %v1085 = vld [vmem:[%s1080 + $0x10] sm:$0xf]
      %v1086 = vld [vmem:[%s1080 + $0x14] sm:$0xf]
      %v1087 = vld [vmem:[%s1080 + $0x18] sm:$0xf]
      %v1088 = vld [vmem:[%s1080 + $0x1c] sm:$0xf]
      %v1089 = vld [vmem:[%s1080 + $0x20] sm:$0xf]
      %v1090 = vld [vmem:[%s1080 + $0x24] sm:$0xf]
      %v1091 = vld [vmem:[%s1080 + $0x28] sm:$0xf]
      %v1092 = vld [vmem:[%s1080 + $0x2c] sm:$0xf]
      %v1093 = vld [vmem:[%s1080 + $0x30] sm:$0xf]
      %v1094 = vld [vmem:[%s1080 + $0x34] sm:$0xf]
      %v1095 = vld [vmem:[%s1080 + $0x38] sm:$0xf]
      %v1096 = vld [vmem:[%s1080 + $0x3c] sm:$0xf]
      %v1113 = vunpack.c.l.b16 %v1081
      %v1114 = vunpack.c.l.b16 %v1082
      %v1115 = vunpack.c.l.b16 %v1083
      %v1116 = vunpack.c.l.b16 %v1084
      %v1117 = vunpack.c.l.b16 %v1085
      %v1118 = vunpack.c.l.b16 %v1086
      %v1119 = vunpack.c.l.b16 %v1087
      %v1120 = vunpack.c.l.b16 %v1088
      %v1121 = vunpack.c.l.b16 %v1089
      %v1122 = vunpack.c.l.b16 %v1090
      %v1123 = vunpack.c.l.b16 %v1091
      %v1124 = vunpack.c.l.b16 %v1092
      %v1125 = vunpack.c.l.b16 %v1093
      %v1126 = vunpack.c.l.b16 %v1094
      %v1127 = vunpack.c.l.b16 %v1095
      %v1128 = vunpack.c.l.b16 %v1096
      %v1129 = vpack.c.b16 %v1114, %v1113
      %v1130 = vpack.c.b16 %v1116, %v1115
      %v1131 = vpack.c.b16 %v1118, %v1117
      %v1132 = vpack.c.b16 %v1120, %v1119
      %v1133 = vpack.c.b16 %v1122, %v1121
      %v1134 = vpack.c.b16 %v1124, %v1123
      %v1135 = vpack.c.b16 %v1126, %v1125
      %v1136 = vpack.c.b16 %v1128, %v1127
      %1145 = vmatpush.bf16.msra.mxu0 %v1136
      %1146 = vmatpush.bf16.msra.mxu0 %v1135
      %1147 = vmatpush.bf16.msra.mxu0 %v1134
      %1148 = vmatpush.bf16.msra.mxu0 %v1133
      %1149 = vmatpush.bf16.msra.mxu0 %v1132
      %1150 = vmatpush.bf16.msra.mxu0 %v1131
      %1151 = vmatpush.bf16.msra.mxu0 %v1130
      %1152 = vmatpush.bf16.msra.mxu0 %v1129
      %1153 = vmatmul.bf16.gmra.mxu0 %v1064
      %v1154 = vpop.f32.mrf.mxu0
      %v1155 = vadd.f32 0.0, %v1154
      %v1156 = vpop.f32.mrf.mxu0
      %v1157 = vadd.f32 0.0, %v1156
      %1158 = vmatmul.bf16.gmra.mxu0 %v1065
      %v1159 = vpop.f32.mrf.mxu0
      %v1160 = vadd.f32 0.0, %v1159
      %v1161 = vpop.f32.mrf.mxu0
      %v1162 = vadd.f32 0.0, %v1161
      %1163 = vmatmul.bf16.gmra.mxu0 %v1066
      %v1164 = vpop.f32.mrf.mxu0
      %v1165 = vadd.f32 0.0, %v1164
      %v1166 = vpop.f32.mrf.mxu0
      %v1167 = vadd.f32 0.0, %v1166
      %1168 = vmatmul.bf16.gmra.mxu0 %v1067
      %v1169 = vpop.f32.mrf.mxu0
      %v1170 = vadd.f32 0.0, %v1169
      %v1171 = vpop.f32.mrf.mxu0
      %v1172 = vadd.f32 0.0, %v1171
      %1173 = vmatmul.bf16.gmra.mxu0 %v1068
      %v1174 = vpop.f32.mrf.mxu0
      %v1175 = vadd.f32 0.0, %v1174
      %v1176 = vpop.f32.mrf.mxu0
      %v1177 = vadd.f32 0.0, %v1176
      %1178 = vmatmul.bf16.gmra.mxu0 %v1069
      %v1179 = vpop.f32.mrf.mxu0
      %v1180 = vadd.f32 0.0, %v1179
      %v1181 = vpop.f32.mrf.mxu0
      %v1182 = vadd.f32 0.0, %v1181
      %1183 = vmatmul.bf16.gmra.mxu0 %v1070
      %v1184 = vpop.f32.mrf.mxu0
      %v1185 = vadd.f32 0.0, %v1184
      %v1186 = vpop.f32.mrf.mxu0
      %v1187 = vadd.f32 0.0, %v1186
      %1188 = vmatmul.bf16.gmra.mxu0 %v1071
      %v1189 = vpop.f32.mrf.mxu0
      %v1190 = vadd.f32 0.0, %v1189
      %v1191 = vpop.f32.mrf.mxu0
      %v1192 = vadd.f32 0.0, %v1191
      %1193 = vmatmul.bf16.gmra.mxu0 %v1072
      %v1194 = vpop.f32.mrf.mxu0
      %v1195 = vadd.f32 0.0, %v1194
      %v1196 = vpop.f32.mrf.mxu0
      %v1197 = vadd.f32 0.0, %v1196
      %1198 = vmatmul.bf16.gmra.mxu0 %v1073
      %v1199 = vpop.f32.mrf.mxu0
      %v1200 = vadd.f32 0.0, %v1199
      %v1201 = vpop.f32.mrf.mxu0
      %v1202 = vadd.f32 0.0, %v1201
      %1203 = vmatmul.bf16.gmra.mxu0 %v1074
      %v1204 = vpop.f32.mrf.mxu0
      %v1205 = vadd.f32 0.0, %v1204
      %v1206 = vpop.f32.mrf.mxu0
      %v1207 = vadd.f32 0.0, %v1206
      %1208 = vmatmul.bf16.gmra.mxu0 %v1075
      %v1209 = vpop.f32.mrf.mxu0
      %v1210 = vadd.f32 0.0, %v1209
      %v1211 = vpop.f32.mrf.mxu0
      %v1212 = vadd.f32 0.0, %v1211
      %1213 = vmatmul.bf16.gmra.mxu0 %v1076
      %v1214 = vpop.f32.mrf.mxu0
      %v1215 = vadd.f32 0.0, %v1214
      %v1216 = vpop.f32.mrf.mxu0
      %v1217 = vadd.f32 0.0, %v1216
      %1218 = vmatmul.bf16.gmra.mxu0 %v1077
      %v1219 = vpop.f32.mrf.mxu0
      %v1220 = vadd.f32 0.0, %v1219
      %v1221 = vpop.f32.mrf.mxu0
      %v1222 = vadd.f32 0.0, %v1221
      %1223 = vmatmul.bf16.gmra.mxu0 %v1078
      %v1224 = vpop.f32.mrf.mxu0
      %v1225 = vadd.f32 0.0, %v1224
      %v1226 = vpop.f32.mrf.mxu0
      %v1227 = vadd.f32 0.0, %v1226
      %1228 = vmatmul.bf16.gmra.mxu0 %v1079
      %v1229 = vpop.f32.mrf.mxu0
      %v1230 = vadd.f32 0.0, %v1229
      %v1231 = vpop.f32.mrf.mxu0
      %v1232 = vadd.f32 0.0, %v1231
      %1233 = vdwg.mxu0
      %v1234 = vadd.f32 %v953, %v1155
      %v1235 = vadd.f32 %v955, %v1157
      %v1236 = vadd.f32 %v958, %v1160
      %v1237 = vadd.f32 %v960, %v1162
      %v1238 = vadd.f32 %v963, %v1165
      %v1239 = vadd.f32 %v965, %v1167
      %v1240 = vadd.f32 %v968, %v1170
      %v1241 = vadd.f32 %v970, %v1172
      %v1242 = vadd.f32 %v973, %v1175
      %v1243 = vadd.f32 %v975, %v1177
      %v1244 = vadd.f32 %v978, %v1180
      %v1245 = vadd.f32 %v980, %v1182
      %v1246 = vadd.f32 %v983, %v1185
      %v1247 = vadd.f32 %v985, %v1187
      %v1248 = vadd.f32 %v988, %v1190
      %v1249 = vadd.f32 %v990, %v1192
      %v1250 = vadd.f32 %v993, %v1195
      %v1251 = vadd.f32 %v995, %v1197
      %v1252 = vadd.f32 %v998, %v1200
      %v1253 = vadd.f32 %v1000, %v1202
      %v1254 = vadd.f32 %v1003, %v1205
      %v1255 = vadd.f32 %v1005, %v1207
      %v1256 = vadd.f32 %v1008, %v1210
      %v1257 = vadd.f32 %v1010, %v1212
      %v1258 = vadd.f32 %v1013, %v1215
      %v1259 = vadd.f32 %v1015, %v1217
      %v1260 = vadd.f32 %v1018, %v1220
      %v1261 = vadd.f32 %v1020, %v1222
      %v1262 = vadd.f32 %v1023, %v1225
      %v1263 = vadd.f32 %v1025, %v1227
      %v1264 = vadd.f32 %v1028, %v1230
      %v1265 = vadd.f32 %v1030, %v1232
      %v1266 = vld [vmem:[%s596] sm:$0xff]
      %v1267 = vld [vmem:[%s596 + $0x8] sm:$0xff]
      %v1268 = vld [vmem:[%s596 + $0x18] sm:$0xff]
      %v1269 = vld [vmem:[%s596 + $0x20] sm:$0xff]
      %v1270 = vld [vmem:[%s596 + $0x30] sm:$0xff]
      %v1271 = vld [vmem:[%s596 + $0x38] sm:$0xff]
      %v1272 = vld [vmem:[%s596 + $0x48] sm:$0xff]
      %v1273 = vld [vmem:[%s596 + $0x50] sm:$0xff]
      %v1274 = vld [vmem:[%s596 + $0x60] sm:$0xff]
      %v1275 = vld [vmem:[%s596 + $0x68] sm:$0xff]
      %v1276 = vld [vmem:[%s596 + $0x78] sm:$0xff]
      %v1277 = vld [vmem:[%s596 + $0x80] sm:$0xff]
      %v1278 = vld [vmem:[%s596 + $0x90] sm:$0xff]
      %v1279 = vld [vmem:[%s596 + $0x98] sm:$0xff]
      %v1280 = vld [vmem:[%s596 + $0xa8] sm:$0xff]
      %v1281 = vld [vmem:[%s596 + $0xb0] sm:$0xff]
      %v1282 = vld [vmem:[%s596 + $0xc0] sm:$0xff]
      %v1283 = vld [vmem:[%s596 + $0xc8] sm:$0xff]
      %v1284 = vld [vmem:[%s596 + $0xd8] sm:$0xff]
      %v1285 = vld [vmem:[%s596 + $0xe0] sm:$0xff]
      %v1286 = vld [vmem:[%s596 + $0xf0] sm:$0xff]
      %v1287 = vld [vmem:[%s596 + $0xf8] sm:$0xff]
      %v1288 = vld [vmem:[%s596 + $0x108] sm:$0xff]
      %v1289 = vld [vmem:[%s596 + $0x110] sm:$0xff]
      %v1290 = vld [vmem:[%s596 + $0x120] sm:$0xff]
      %v1291 = vld [vmem:[%s596 + $0x128] sm:$0xff]
      %v1292 = vld [vmem:[%s596 + $0x138] sm:$0xff]
      %v1293 = vld [vmem:[%s596 + $0x140] sm:$0xff]
      %v1294 = vld [vmem:[%s596 + $0x150] sm:$0xff]
      %v1295 = vld [vmem:[%s596 + $0x158] sm:$0xff]
      %v1296 = vld [vmem:[%s596 + $0x168] sm:$0xff]
      %v1297 = vld [vmem:[%s596 + $0x170] sm:$0xff]
      %v1298 = vpack.c.bf16 %v1267, %v1266
      %v1299 = vpack.c.bf16 %v1269, %v1268
      %v1300 = vpack.c.bf16 %v1271, %v1270
      %v1301 = vpack.c.bf16 %v1273, %v1272
      %v1302 = vpack.c.bf16 %v1275, %v1274
      %v1303 = vpack.c.bf16 %v1277, %v1276
      %v1304 = vpack.c.bf16 %v1279, %v1278
      %v1305 = vpack.c.bf16 %v1281, %v1280
      %v1306 = vpack.c.bf16 %v1283, %v1282
      %v1307 = vpack.c.bf16 %v1285, %v1284
      %v1308 = vpack.c.bf16 %v1287, %v1286
      %v1309 = vpack.c.bf16 %v1289, %v1288
      %v1310 = vpack.c.bf16 %v1291, %v1290
      %v1311 = vpack.c.bf16 %v1293, %v1292
      %v1312 = vpack.c.bf16 %v1295, %v1294
      %v1313 = vpack.c.bf16 %v1297, %v1296
      %s1314 = scalar_lea.vmem %s3, 192
      %v1315 = vld [vmem:[%s1314] sm:$0xf]
      %v1316 = vld [vmem:[%s1314 + $0x4] sm:$0xf]
      %v1317 = vld [vmem:[%s1314 + $0x8] sm:$0xf]
      %v1318 = vld [vmem:[%s1314 + $0xc] sm:$0xf]
      %v1319 = vld [vmem:[%s1314 + $0x10] sm:$0xf]
      %v1320 = vld [vmem:[%s1314 + $0x14] sm:$0xf]
      %v1321 = vld [vmem:[%s1314 + $0x18] sm:$0xf]
      %v1322 = vld [vmem:[%s1314 + $0x1c] sm:$0xf]
      %v1323 = vld [vmem:[%s1314 + $0x20] sm:$0xf]
      %v1324 = vld [vmem:[%s1314 + $0x24] sm:$0xf]
      %v1325 = vld [vmem:[%s1314 + $0x28] sm:$0xf]
      %v1326 = vld [vmem:[%s1314 + $0x2c] sm:$0xf]
      %v1327 = vld [vmem:[%s1314 + $0x30] sm:$0xf]
      %v1328 = vld [vmem:[%s1314 + $0x34] sm:$0xf]
      %v1329 = vld [vmem:[%s1314 + $0x38] sm:$0xf]
      %v1330 = vld [vmem:[%s1314 + $0x3c] sm:$0xf]
      %v1347 = vunpack.c.l.b16 %v1315
      %v1348 = vunpack.c.l.b16 %v1316
      %v1349 = vunpack.c.l.b16 %v1317
      %v1350 = vunpack.c.l.b16 %v1318
      %v1351 = vunpack.c.l.b16 %v1319
      %v1352 = vunpack.c.l.b16 %v1320
      %v1353 = vunpack.c.l.b16 %v1321
      %v1354 = vunpack.c.l.b16 %v1322
      %v1355 = vunpack.c.l.b16 %v1323
      %v1356 = vunpack.c.l.b16 %v1324
      %v1357 = vunpack.c.l.b16 %v1325
      %v1358 = vunpack.c.l.b16 %v1326
      %v1359 = vunpack.c.l.b16 %v1327
      %v1360 = vunpack.c.l.b16 %v1328
      %v1361 = vunpack.c.l.b16 %v1329
      %v1362 = vunpack.c.l.b16 %v1330
      %v1363 = vpack.c.b16 %v1348, %v1347
      %v1364 = vpack.c.b16 %v1350, %v1349
      %v1365 = vpack.c.b16 %v1352, %v1351
      %v1366 = vpack.c.b16 %v1354, %v1353
      %v1367 = vpack.c.b16 %v1356, %v1355
      %v1368 = vpack.c.b16 %v1358, %v1357
      %v1369 = vpack.c.b16 %v1360, %v1359
      %v1370 = vpack.c.b16 %v1362, %v1361
      %1379 = vmatpush.bf16.msra.mxu0 %v1370
      %1380 = vmatpush.bf16.msra.mxu0 %v1369
      %1381 = vmatpush.bf16.msra.mxu0 %v1368
      %1382 = vmatpush.bf16.msra.mxu0 %v1367
      %1383 = vmatpush.bf16.msra.mxu0 %v1366
      %1384 = vmatpush.bf16.msra.mxu0 %v1365
      %1385 = vmatpush.bf16.msra.mxu0 %v1364
      %1386 = vmatpush.bf16.msra.mxu0 %v1363
      %1387 = vmatmul.bf16.gmra.mxu0 %v1298
      %v1388 = vpop.f32.mrf.mxu0
      %v1389 = vadd.f32 0.0, %v1388
      %v1390 = vpop.f32.mrf.mxu0
      %v1391 = vadd.f32 0.0, %v1390
      %1392 = vmatmul.bf16.gmra.mxu0 %v1299
      %v1393 = vpop.f32.mrf.mxu0
      %v1394 = vadd.f32 0.0, %v1393
      %v1395 = vpop.f32.mrf.mxu0
      %v1396 = vadd.f32 0.0, %v1395
      %1397 = vmatmul.bf16.gmra.mxu0 %v1300
      %v1398 = vpop.f32.mrf.mxu0
      %v1399 = vadd.f32 0.0, %v1398
      %v1400 = vpop.f32.mrf.mxu0
      %v1401 = vadd.f32 0.0, %v1400
      %1402 = vmatmul.bf16.gmra.mxu0 %v1301
      %v1403 = vpop.f32.mrf.mxu0
      %v1404 = vadd.f32 0.0, %v1403
      %v1405 = vpop.f32.mrf.mxu0
      %v1406 = vadd.f32 0.0, %v1405
      %1407 = vmatmul.bf16.gmra.mxu0 %v1302
      %v1408 = vpop.f32.mrf.mxu0
      %v1409 = vadd.f32 0.0, %v1408
      %v1410 = vpop.f32.mrf.mxu0
      %v1411 = vadd.f32 0.0, %v1410
      %1412 = vmatmul.bf16.gmra.mxu0 %v1303
      %v1413 = vpop.f32.mrf.mxu0
      %v1414 = vadd.f32 0.0, %v1413
      %v1415 = vpop.f32.mrf.mxu0
      %v1416 = vadd.f32 0.0, %v1415
      %1417 = vmatmul.bf16.gmra.mxu0 %v1304
      %v1418 = vpop.f32.mrf.mxu0
      %v1419 = vadd.f32 0.0, %v1418
      %v1420 = vpop.f32.mrf.mxu0
      %v1421 = vadd.f32 0.0, %v1420
      %1422 = vmatmul.bf16.gmra.mxu0 %v1305
      %v1423 = vpop.f32.mrf.mxu0
      %v1424 = vadd.f32 0.0, %v1423
      %v1425 = vpop.f32.mrf.mxu0
      %v1426 = vadd.f32 0.0, %v1425
      %1427 = vmatmul.bf16.gmra.mxu0 %v1306
      %v1428 = vpop.f32.mrf.mxu0
      %v1429 = vadd.f32 0.0, %v1428
      %v1430 = vpop.f32.mrf.mxu0
      %v1431 = vadd.f32 0.0, %v1430
      %1432 = vmatmul.bf16.gmra.mxu0 %v1307
      %v1433 = vpop.f32.mrf.mxu0
      %v1434 = vadd.f32 0.0, %v1433
      %v1435 = vpop.f32.mrf.mxu0
      %v1436 = vadd.f32 0.0, %v1435
      %1437 = vmatmul.bf16.gmra.mxu0 %v1308
      %v1438 = vpop.f32.mrf.mxu0
      %v1439 = vadd.f32 0.0, %v1438
      %v1440 = vpop.f32.mrf.mxu0
      %v1441 = vadd.f32 0.0, %v1440
      %1442 = vmatmul.bf16.gmra.mxu0 %v1309
      %v1443 = vpop.f32.mrf.mxu0
      %v1444 = vadd.f32 0.0, %v1443
      %v1445 = vpop.f32.mrf.mxu0
      %v1446 = vadd.f32 0.0, %v1445
      %1447 = vmatmul.bf16.gmra.mxu0 %v1310
      %v1448 = vpop.f32.mrf.mxu0
      %v1449 = vadd.f32 0.0, %v1448
      %v1450 = vpop.f32.mrf.mxu0
      %v1451 = vadd.f32 0.0, %v1450
      %1452 = vmatmul.bf16.gmra.mxu0 %v1311
      %v1453 = vpop.f32.mrf.mxu0
      %v1454 = vadd.f32 0.0, %v1453
      %v1455 = vpop.f32.mrf.mxu0
      %v1456 = vadd.f32 0.0, %v1455
      %1457 = vmatmul.bf16.gmra.mxu0 %v1312
      %v1458 = vpop.f32.mrf.mxu0
      %v1459 = vadd.f32 0.0, %v1458
      %v1460 = vpop.f32.mrf.mxu0
      %v1461 = vadd.f32 0.0, %v1460
      %1462 = vmatmul.bf16.gmra.mxu0 %v1313
      %v1463 = vpop.f32.mrf.mxu0
      %v1464 = vadd.f32 0.0, %v1463
      %v1465 = vpop.f32.mrf.mxu0
      %v1466 = vadd.f32 0.0, %v1465
      %1467 = vdwg.mxu0
      %v1468 = vadd.f32 %v1234, %v1389
      %v1469 = vadd.f32 %v1235, %v1391
      %v1470 = vadd.f32 %v1236, %v1394
      %v1471 = vadd.f32 %v1237, %v1396
      %v1472 = vadd.f32 %v1238, %v1399
      %v1473 = vadd.f32 %v1239, %v1401
      %v1474 = vadd.f32 %v1240, %v1404
      %v1475 = vadd.f32 %v1241, %v1406
      %v1476 = vadd.f32 %v1242, %v1409
      %v1477 = vadd.f32 %v1243, %v1411
      %v1478 = vadd.f32 %v1244, %v1414
      %v1479 = vadd.f32 %v1245, %v1416
      %v1480 = vadd.f32 %v1246, %v1419
      %v1481 = vadd.f32 %v1247, %v1421
      %v1482 = vadd.f32 %v1248, %v1424
      %v1483 = vadd.f32 %v1249, %v1426
      %v1484 = vadd.f32 %v1250, %v1429
      %v1485 = vadd.f32 %v1251, %v1431
      %v1486 = vadd.f32 %v1252, %v1434
      %v1487 = vadd.f32 %v1253, %v1436
      %v1488 = vadd.f32 %v1254, %v1439
      %v1489 = vadd.f32 %v1255, %v1441
      %v1490 = vadd.f32 %v1256, %v1444
      %v1491 = vadd.f32 %v1257, %v1446
      %v1492 = vadd.f32 %v1258, %v1449
      %v1493 = vadd.f32 %v1259, %v1451
      %v1494 = vadd.f32 %v1260, %v1454
      %v1495 = vadd.f32 %v1261, %v1456
      %v1496 = vadd.f32 %v1262, %v1459
      %v1497 = vadd.f32 %v1263, %v1461
      %v1498 = vadd.f32 %v1264, %v1464
      %v1499 = vadd.f32 %v1265, %v1466
      %v1500 = vld [vmem:[%s596 + $0x1] sm:$0xff]
      %v1501 = vld [vmem:[%s596 + $0x9] sm:$0xff]
      %v1502 = vld [vmem:[%s596 + $0x19] sm:$0xff]
      %v1503 = vld [vmem:[%s596 + $0x21] sm:$0xff]
      %v1504 = vld [vmem:[%s596 + $0x31] sm:$0xff]
      %v1505 = vld [vmem:[%s596 + $0x39] sm:$0xff]
      %v1506 = vld [vmem:[%s596 + $0x49] sm:$0xff]
      %v1507 = vld [vmem:[%s596 + $0x51] sm:$0xff]
      %v1508 = vld [vmem:[%s596 + $0x61] sm:$0xff]
      %v1509 = vld [vmem:[%s596 + $0x69] sm:$0xff]
      %v1510 = vld [vmem:[%s596 + $0x79] sm:$0xff]
      %v1511 = vld [vmem:[%s596 + $0x81] sm:$0xff]
      %v1512 = vld [vmem:[%s596 + $0x91] sm:$0xff]
      %v1513 = vld [vmem:[%s596 + $0x99] sm:$0xff]
      %v1514 = vld [vmem:[%s596 + $0xa9] sm:$0xff]
      %v1515 = vld [vmem:[%s596 + $0xb1] sm:$0xff]
      %v1516 = vld [vmem:[%s596 + $0xc1] sm:$0xff]
      %v1517 = vld [vmem:[%s596 + $0xc9] sm:$0xff]
      %v1518 = vld [vmem:[%s596 + $0xd9] sm:$0xff]
      %v1519 = vld [vmem:[%s596 + $0xe1] sm:$0xff]
      %v1520 = vld [vmem:[%s596 + $0xf1] sm:$0xff]
      %v1521 = vld [vmem:[%s596 + $0xf9] sm:$0xff]
      %v1522 = vld [vmem:[%s596 + $0x109] sm:$0xff]
      %v1523 = vld [vmem:[%s596 + $0x111] sm:$0xff]
      %v1524 = vld [vmem:[%s596 + $0x121] sm:$0xff]
      %v1525 = vld [vmem:[%s596 + $0x129] sm:$0xff]
      %v1526 = vld [vmem:[%s596 + $0x139] sm:$0xff]
      %v1527 = vld [vmem:[%s596 + $0x141] sm:$0xff]
      %v1528 = vld [vmem:[%s596 + $0x151] sm:$0xff]
      %v1529 = vld [vmem:[%s596 + $0x159] sm:$0xff]
      %v1530 = vld [vmem:[%s596 + $0x169] sm:$0xff]
      %v1531 = vld [vmem:[%s596 + $0x171] sm:$0xff]
      %v1532 = vpack.c.bf16 %v1501, %v1500
      %v1533 = vpack.c.bf16 %v1503, %v1502
      %v1534 = vpack.c.bf16 %v1505, %v1504
      %v1535 = vpack.c.bf16 %v1507, %v1506
      %v1536 = vpack.c.bf16 %v1509, %v1508
      %v1537 = vpack.c.bf16 %v1511, %v1510
      %v1538 = vpack.c.bf16 %v1513, %v1512
      %v1539 = vpack.c.bf16 %v1515, %v1514
      %v1540 = vpack.c.bf16 %v1517, %v1516
      %v1541 = vpack.c.bf16 %v1519, %v1518
      %v1542 = vpack.c.bf16 %v1521, %v1520
      %v1543 = vpack.c.bf16 %v1523, %v1522
      %v1544 = vpack.c.bf16 %v1525, %v1524
      %v1545 = vpack.c.bf16 %v1527, %v1526
      %v1546 = vpack.c.bf16 %v1529, %v1528
      %v1547 = vpack.c.bf16 %v1531, %v1530
      %s1548 = scalar_lea.vmem %s3, 256
      %v1549 = vld [vmem:[%s1548] sm:$0xf]
      %v1550 = vld [vmem:[%s1548 + $0x4] sm:$0xf]
      %v1551 = vld [vmem:[%s1548 + $0x8] sm:$0xf]
      %v1552 = vld [vmem:[%s1548 + $0xc] sm:$0xf]
      %v1553 = vld [vmem:[%s1548 + $0x10] sm:$0xf]
      %v1554 = vld [vmem:[%s1548 + $0x14] sm:$0xf]
      %v1555 = vld [vmem:[%s1548 + $0x18] sm:$0xf]
      %v1556 = vld [vmem:[%s1548 + $0x1c] sm:$0xf]
      %v1557 = vld [vmem:[%s1548 + $0x20] sm:$0xf]
      %v1558 = vld [vmem:[%s1548 + $0x24] sm:$0xf]
      %v1559 = vld [vmem:[%s1548 + $0x28] sm:$0xf]
      %v1560 = vld [vmem:[%s1548 + $0x2c] sm:$0xf]
      %v1561 = vld [vmem:[%s1548 + $0x30] sm:$0xf]
      %v1562 = vld [vmem:[%s1548 + $0x34] sm:$0xf]
      %v1563 = vld [vmem:[%s1548 + $0x38] sm:$0xf]
      %v1564 = vld [vmem:[%s1548 + $0x3c] sm:$0xf]
      %v1581 = vunpack.c.l.b16 %v1549
      %v1582 = vunpack.c.l.b16 %v1550
      %v1583 = vunpack.c.l.b16 %v1551
      %v1584 = vunpack.c.l.b16 %v1552
      %v1585 = vunpack.c.l.b16 %v1553
      %v1586 = vunpack.c.l.b16 %v1554
      %v1587 = vunpack.c.l.b16 %v1555
      %v1588 = vunpack.c.l.b16 %v1556
      %v1589 = vunpack.c.l.b16 %v1557
      %v1590 = vunpack.c.l.b16 %v1558
      %v1591 = vunpack.c.l.b16 %v1559
      %v1592 = vunpack.c.l.b16 %v1560
      %v1593 = vunpack.c.l.b16 %v1561
      %v1594 = vunpack.c.l.b16 %v1562
      %v1595 = vunpack.c.l.b16 %v1563
      %v1596 = vunpack.c.l.b16 %v1564
      %v1597 = vpack.c.b16 %v1582, %v1581
      %v1598 = vpack.c.b16 %v1584, %v1583
      %v1599 = vpack.c.b16 %v1586, %v1585
      %v1600 = vpack.c.b16 %v1588, %v1587
      %v1601 = vpack.c.b16 %v1590, %v1589
      %v1602 = vpack.c.b16 %v1592, %v1591
      %v1603 = vpack.c.b16 %v1594, %v1593
      %v1604 = vpack.c.b16 %v1596, %v1595
      %1613 = vmatpush.bf16.msra.mxu0 %v1604
      %1614 = vmatpush.bf16.msra.mxu0 %v1603
      %1615 = vmatpush.bf16.msra.mxu0 %v1602
      %1616 = vmatpush.bf16.msra.mxu0 %v1601
      %1617 = vmatpush.bf16.msra.mxu0 %v1600
      %1618 = vmatpush.bf16.msra.mxu0 %v1599
      %1619 = vmatpush.bf16.msra.mxu0 %v1598
      %1620 = vmatpush.bf16.msra.mxu0 %v1597
      %1621 = vmatmul.bf16.gmra.mxu0 %v1532
      %v1622 = vpop.f32.mrf.mxu0
      %v1623 = vadd.f32 0.0, %v1622
      %v1624 = vpop.f32.mrf.mxu0
      %v1625 = vadd.f32 0.0, %v1624
      %1626 = vmatmul.bf16.gmra.mxu0 %v1533
      %v1627 = vpop.f32.mrf.mxu0
      %v1628 = vadd.f32 0.0, %v1627
      %v1629 = vpop.f32.mrf.mxu0
      %v1630 = vadd.f32 0.0, %v1629
      %1631 = vmatmul.bf16.gmra.mxu0 %v1534
      %v1632 = vpop.f32.mrf.mxu0
      %v1633 = vadd.f32 0.0, %v1632
      %v1634 = vpop.f32.mrf.mxu0
      %v1635 = vadd.f32 0.0, %v1634
      %1636 = vmatmul.bf16.gmra.mxu0 %v1535
      %v1637 = vpop.f32.mrf.mxu0
      %v1638 = vadd.f32 0.0, %v1637
      %v1639 = vpop.f32.mrf.mxu0
      %v1640 = vadd.f32 0.0, %v1639
      %1641 = vmatmul.bf16.gmra.mxu0 %v1536
      %v1642 = vpop.f32.mrf.mxu0
      %v1643 = vadd.f32 0.0, %v1642
      %v1644 = vpop.f32.mrf.mxu0
      %v1645 = vadd.f32 0.0, %v1644
      %1646 = vmatmul.bf16.gmra.mxu0 %v1537
      %v1647 = vpop.f32.mrf.mxu0
      %v1648 = vadd.f32 0.0, %v1647
      %v1649 = vpop.f32.mrf.mxu0
      %v1650 = vadd.f32 0.0, %v1649
      %1651 = vmatmul.bf16.gmra.mxu0 %v1538
      %v1652 = vpop.f32.mrf.mxu0
      %v1653 = vadd.f32 0.0, %v1652
      %v1654 = vpop.f32.mrf.mxu0
      %v1655 = vadd.f32 0.0, %v1654
      %1656 = vmatmul.bf16.gmra.mxu0 %v1539
      %v1657 = vpop.f32.mrf.mxu0
      %v1658 = vadd.f32 0.0, %v1657
      %v1659 = vpop.f32.mrf.mxu0
      %v1660 = vadd.f32 0.0, %v1659
      %1661 = vmatmul.bf16.gmra.mxu0 %v1540
      %v1662 = vpop.f32.mrf.mxu0
      %v1663 = vadd.f32 0.0, %v1662
      %v1664 = vpop.f32.mrf.mxu0
      %v1665 = vadd.f32 0.0, %v1664
      %1666 = vmatmul.bf16.gmra.mxu0 %v1541
      %v1667 = vpop.f32.mrf.mxu0
      %v1668 = vadd.f32 0.0, %v1667
      %v1669 = vpop.f32.mrf.mxu0
      %v1670 = vadd.f32 0.0, %v1669
      %1671 = vmatmul.bf16.gmra.mxu0 %v1542
      %v1672 = vpop.f32.mrf.mxu0
      %v1673 = vadd.f32 0.0, %v1672
      %v1674 = vpop.f32.mrf.mxu0
      %v1675 = vadd.f32 0.0, %v1674
      %1676 = vmatmul.bf16.gmra.mxu0 %v1543
      %v1677 = vpop.f32.mrf.mxu0
      %v1678 = vadd.f32 0.0, %v1677
      %v1679 = vpop.f32.mrf.mxu0
      %v1680 = vadd.f32 0.0, %v1679
      %1681 = vmatmul.bf16.gmra.mxu0 %v1544
      %v1682 = vpop.f32.mrf.mxu0
      %v1683 = vadd.f32 0.0, %v1682
      %v1684 = vpop.f32.mrf.mxu0
      %v1685 = vadd.f32 0.0, %v1684
      %1686 = vmatmul.bf16.gmra.mxu0 %v1545
      %v1687 = vpop.f32.mrf.mxu0
      %v1688 = vadd.f32 0.0, %v1687
      %v1689 = vpop.f32.mrf.mxu0
      %v1690 = vadd.f32 0.0, %v1689
      %1691 = vmatmul.bf16.gmra.mxu0 %v1546
      %v1692 = vpop.f32.mrf.mxu0
      %v1693 = vadd.f32 0.0, %v1692
      %v1694 = vpop.f32.mrf.mxu0
      %v1695 = vadd.f32 0.0, %v1694
      %1696 = vmatmul.bf16.gmra.mxu0 %v1547
      %v1697 = vpop.f32.mrf.mxu0
      %v1698 = vadd.f32 0.0, %v1697
      %v1699 = vpop.f32.mrf.mxu0
      %v1700 = vadd.f32 0.0, %v1699
      %1701 = vdwg.mxu0
      %v1702 = vadd.f32 %v1468, %v1623
      %v1703 = vadd.f32 %v1469, %v1625
      %v1704 = vadd.f32 %v1470, %v1628
      %v1705 = vadd.f32 %v1471, %v1630
      %v1706 = vadd.f32 %v1472, %v1633
      %v1707 = vadd.f32 %v1473, %v1635
      %v1708 = vadd.f32 %v1474, %v1638
      %v1709 = vadd.f32 %v1475, %v1640
      %v1710 = vadd.f32 %v1476, %v1643
      %v1711 = vadd.f32 %v1477, %v1645
      %v1712 = vadd.f32 %v1478, %v1648
      %v1713 = vadd.f32 %v1479, %v1650
      %v1714 = vadd.f32 %v1480, %v1653
      %v1715 = vadd.f32 %v1481, %v1655
      %v1716 = vadd.f32 %v1482, %v1658
      %v1717 = vadd.f32 %v1483, %v1660
      %v1718 = vadd.f32 %v1484, %v1663
      %v1719 = vadd.f32 %v1485, %v1665
      %v1720 = vadd.f32 %v1486, %v1668
      %v1721 = vadd.f32 %v1487, %v1670
      %v1722 = vadd.f32 %v1488, %v1673
      %v1723 = vadd.f32 %v1489, %v1675
      %v1724 = vadd.f32 %v1490, %v1678
      %v1725 = vadd.f32 %v1491, %v1680
      %v1726 = vadd.f32 %v1492, %v1683
      %v1727 = vadd.f32 %v1493, %v1685
      %v1728 = vadd.f32 %v1494, %v1688
      %v1729 = vadd.f32 %v1495, %v1690
      %v1730 = vadd.f32 %v1496, %v1693
      %v1731 = vadd.f32 %v1497, %v1695
      %v1732 = vadd.f32 %v1498, %v1698
      %v1733 = vadd.f32 %v1499, %v1700
      %v1734 = vld [vmem:[%s596 + $0x2] sm:$0xff]
      %v1735 = vld [vmem:[%s596 + $0xa] sm:$0xff]
      %v1736 = vld [vmem:[%s596 + $0x1a] sm:$0xff]
      %v1737 = vld [vmem:[%s596 + $0x22] sm:$0xff]
      %v1738 = vld [vmem:[%s596 + $0x32] sm:$0xff]
      %v1739 = vld [vmem:[%s596 + $0x3a] sm:$0xff]
      %v1740 = vld [vmem:[%s596 + $0x4a] sm:$0xff]
      %v1741 = vld [vmem:[%s596 + $0x52] sm:$0xff]
      %v1742 = vld [vmem:[%s596 + $0x62] sm:$0xff]
      %v1743 = vld [vmem:[%s596 + $0x6a] sm:$0xff]
      %v1744 = vld [vmem:[%s596 + $0x7a] sm:$0xff]
      %v1745 = vld [vmem:[%s596 + $0x82] sm:$0xff]
      %v1746 = vld [vmem:[%s596 + $0x92] sm:$0xff]
      %v1747 = vld [vmem:[%s596 + $0x9a] sm:$0xff]
      %v1748 = vld [vmem:[%s596 + $0xaa] sm:$0xff]
      %v1749 = vld [vmem:[%s596 + $0xb2] sm:$0xff]
      %v1750 = vld [vmem:[%s596 + $0xc2] sm:$0xff]
      %v1751 = vld [vmem:[%s596 + $0xca] sm:$0xff]
      %v1752 = vld [vmem:[%s596 + $0xda] sm:$0xff]
      %v1753 = vld [vmem:[%s596 + $0xe2] sm:$0xff]
      %v1754 = vld [vmem:[%s596 + $0xf2] sm:$0xff]
      %v1755 = vld [vmem:[%s596 + $0xfa] sm:$0xff]
      %v1756 = vld [vmem:[%s596 + $0x10a] sm:$0xff]
      %v1757 = vld [vmem:[%s596 + $0x112] sm:$0xff]
      %v1758 = vld [vmem:[%s596 + $0x122] sm:$0xff]
      %v1759 = vld [vmem:[%s596 + $0x12a] sm:$0xff]
      %v1760 = vld [vmem:[%s596 + $0x13a] sm:$0xff]
      %v1761 = vld [vmem:[%s596 + $0x142] sm:$0xff]
      %v1762 = vld [vmem:[%s596 + $0x152] sm:$0xff]
      %v1763 = vld [vmem:[%s596 + $0x15a] sm:$0xff]
      %v1764 = vld [vmem:[%s596 + $0x16a] sm:$0xff]
      %v1765 = vld [vmem:[%s596 + $0x172] sm:$0xff]
      %v1766 = vpack.c.bf16 %v1735, %v1734
      %v1767 = vpack.c.bf16 %v1737, %v1736
      %v1768 = vpack.c.bf16 %v1739, %v1738
      %v1769 = vpack.c.bf16 %v1741, %v1740
      %v1770 = vpack.c.bf16 %v1743, %v1742
      %v1771 = vpack.c.bf16 %v1745, %v1744
      %v1772 = vpack.c.bf16 %v1747, %v1746
      %v1773 = vpack.c.bf16 %v1749, %v1748
      %v1774 = vpack.c.bf16 %v1751, %v1750
      %v1775 = vpack.c.bf16 %v1753, %v1752
      %v1776 = vpack.c.bf16 %v1755, %v1754
      %v1777 = vpack.c.bf16 %v1757, %v1756
      %v1778 = vpack.c.bf16 %v1759, %v1758
      %v1779 = vpack.c.bf16 %v1761, %v1760
      %v1780 = vpack.c.bf16 %v1763, %v1762
      %v1781 = vpack.c.bf16 %v1765, %v1764
      %s1782 = scalar_lea.vmem %s3, 320
      %v1783 = vld [vmem:[%s1782] sm:$0xf]
      %v1784 = vld [vmem:[%s1782 + $0x4] sm:$0xf]
      %v1785 = vld [vmem:[%s1782 + $0x8] sm:$0xf]
      %v1786 = vld [vmem:[%s1782 + $0xc] sm:$0xf]
      %v1787 = vld [vmem:[%s1782 + $0x10] sm:$0xf]
      %v1788 = vld [vmem:[%s1782 + $0x14] sm:$0xf]
      %v1789 = vld [vmem:[%s1782 + $0x18] sm:$0xf]
      %v1790 = vld [vmem:[%s1782 + $0x1c] sm:$0xf]
      %v1791 = vld [vmem:[%s1782 + $0x20] sm:$0xf]
      %v1792 = vld [vmem:[%s1782 + $0x24] sm:$0xf]
      %v1793 = vld [vmem:[%s1782 + $0x28] sm:$0xf]
      %v1794 = vld [vmem:[%s1782 + $0x2c] sm:$0xf]
      %v1795 = vld [vmem:[%s1782 + $0x30] sm:$0xf]
      %v1796 = vld [vmem:[%s1782 + $0x34] sm:$0xf]
      %v1797 = vld [vmem:[%s1782 + $0x38] sm:$0xf]
      %v1798 = vld [vmem:[%s1782 + $0x3c] sm:$0xf]
      %v1815 = vunpack.c.l.b16 %v1783
      %v1816 = vunpack.c.l.b16 %v1784
      %v1817 = vunpack.c.l.b16 %v1785
      %v1818 = vunpack.c.l.b16 %v1786
      %v1819 = vunpack.c.l.b16 %v1787
      %v1820 = vunpack.c.l.b16 %v1788
      %v1821 = vunpack.c.l.b16 %v1789
      %v1822 = vunpack.c.l.b16 %v1790
      %v1823 = vunpack.c.l.b16 %v1791
      %v1824 = vunpack.c.l.b16 %v1792
      %v1825 = vunpack.c.l.b16 %v1793
      %v1826 = vunpack.c.l.b16 %v1794
      %v1827 = vunpack.c.l.b16 %v1795
      %v1828 = vunpack.c.l.b16 %v1796
      %v1829 = vunpack.c.l.b16 %v1797
      %v1830 = vunpack.c.l.b16 %v1798
      %v1831 = vpack.c.b16 %v1816, %v1815
      %v1832 = vpack.c.b16 %v1818, %v1817
      %v1833 = vpack.c.b16 %v1820, %v1819
      %v1834 = vpack.c.b16 %v1822, %v1821
      %v1835 = vpack.c.b16 %v1824, %v1823
      %v1836 = vpack.c.b16 %v1826, %v1825
      %v1837 = vpack.c.b16 %v1828, %v1827
      %v1838 = vpack.c.b16 %v1830, %v1829
      %1847 = vmatpush.bf16.msra.mxu0 %v1838
      %1848 = vmatpush.bf16.msra.mxu0 %v1837
      %1849 = vmatpush.bf16.msra.mxu0 %v1836
      %1850 = vmatpush.bf16.msra.mxu0 %v1835
      %1851 = vmatpush.bf16.msra.mxu0 %v1834
      %1852 = vmatpush.bf16.msra.mxu0 %v1833
      %1853 = vmatpush.bf16.msra.mxu0 %v1832
      %1854 = vmatpush.bf16.msra.mxu0 %v1831
      %1855 = vmatmul.bf16.gmra.mxu0 %v1766
      %v1856 = vpop.f32.mrf.mxu0
      %v1857 = vadd.f32 0.0, %v1856
      %v1858 = vpop.f32.mrf.mxu0
      %v1859 = vadd.f32 0.0, %v1858
      %1860 = vmatmul.bf16.gmra.mxu0 %v1767
      %v1861 = vpop.f32.mrf.mxu0
      %v1862 = vadd.f32 0.0, %v1861
      %v1863 = vpop.f32.mrf.mxu0
      %v1864 = vadd.f32 0.0, %v1863
      %1865 = vmatmul.bf16.gmra.mxu0 %v1768
      %v1866 = vpop.f32.mrf.mxu0
      %v1867 = vadd.f32 0.0, %v1866
      %v1868 = vpop.f32.mrf.mxu0
      %v1869 = vadd.f32 0.0, %v1868
      %1870 = vmatmul.bf16.gmra.mxu0 %v1769
      %v1871 = vpop.f32.mrf.mxu0
      %v1872 = vadd.f32 0.0, %v1871
      %v1873 = vpop.f32.mrf.mxu0
      %v1874 = vadd.f32 0.0, %v1873
      %1875 = vmatmul.bf16.gmra.mxu0 %v1770
      %v1876 = vpop.f32.mrf.mxu0
      %v1877 = vadd.f32 0.0, %v1876
      %v1878 = vpop.f32.mrf.mxu0
      %v1879 = vadd.f32 0.0, %v1878
      %1880 = vmatmul.bf16.gmra.mxu0 %v1771
      %v1881 = vpop.f32.mrf.mxu0
      %v1882 = vadd.f32 0.0, %v1881
      %v1883 = vpop.f32.mrf.mxu0
      %v1884 = vadd.f32 0.0, %v1883
      %1885 = vmatmul.bf16.gmra.mxu0 %v1772
      %v1886 = vpop.f32.mrf.mxu0
      %v1887 = vadd.f32 0.0, %v1886
      %v1888 = vpop.f32.mrf.mxu0
      %v1889 = vadd.f32 0.0, %v1888
      %1890 = vmatmul.bf16.gmra.mxu0 %v1773
      %v1891 = vpop.f32.mrf.mxu0
      %v1892 = vadd.f32 0.0, %v1891
      %v1893 = vpop.f32.mrf.mxu0
      %v1894 = vadd.f32 0.0, %v1893
      %1895 = vmatmul.bf16.gmra.mxu0 %v1774
      %v1896 = vpop.f32.mrf.mxu0
      %v1897 = vadd.f32 0.0, %v1896
      %v1898 = vpop.f32.mrf.mxu0
      %v1899 = vadd.f32 0.0, %v1898
      %1900 = vmatmul.bf16.gmra.mxu0 %v1775
      %v1901 = vpop.f32.mrf.mxu0
      %v1902 = vadd.f32 0.0, %v1901
      %v1903 = vpop.f32.mrf.mxu0
      %v1904 = vadd.f32 0.0, %v1903
      %1905 = vmatmul.bf16.gmra.mxu0 %v1776
      %v1906 = vpop.f32.mrf.mxu0
      %v1907 = vadd.f32 0.0, %v1906
      %v1908 = vpop.f32.mrf.mxu0
      %v1909 = vadd.f32 0.0, %v1908
      %1910 = vmatmul.bf16.gmra.mxu0 %v1777
      %v1911 = vpop.f32.mrf.mxu0
      %v1912 = vadd.f32 0.0, %v1911
      %v1913 = vpop.f32.mrf.mxu0
      %v1914 = vadd.f32 0.0, %v1913
      %1915 = vmatmul.bf16.gmra.mxu0 %v1778
      %v1916 = vpop.f32.mrf.mxu0
      %v1917 = vadd.f32 0.0, %v1916
      %v1918 = vpop.f32.mrf.mxu0
      %v1919 = vadd.f32 0.0, %v1918
      %1920 = vmatmul.bf16.gmra.mxu0 %v1779
      %v1921 = vpop.f32.mrf.mxu0
      %v1922 = vadd.f32 0.0, %v1921
      %v1923 = vpop.f32.mrf.mxu0
      %v1924 = vadd.f32 0.0, %v1923
      %1925 = vmatmul.bf16.gmra.mxu0 %v1780
      %v1926 = vpop.f32.mrf.mxu0
      %v1927 = vadd.f32 0.0, %v1926
      %v1928 = vpop.f32.mrf.mxu0
      %v1929 = vadd.f32 0.0, %v1928
      %1930 = vmatmul.bf16.gmra.mxu0 %v1781
      %v1931 = vpop.f32.mrf.mxu0
      %v1932 = vadd.f32 0.0, %v1931
      %v1933 = vpop.f32.mrf.mxu0
      %v1934 = vadd.f32 0.0, %v1933
      %1935 = vdwg.mxu0
      %v1936 = vadd.f32 %v1702, %v1857
      %v1937 = vadd.f32 %v1703, %v1859
      %v1938 = vadd.f32 %v1704, %v1862
      %v1939 = vadd.f32 %v1705, %v1864
      %v1940 = vadd.f32 %v1706, %v1867
      %v1941 = vadd.f32 %v1707, %v1869
      %v1942 = vadd.f32 %v1708, %v1872
      %v1943 = vadd.f32 %v1709, %v1874
      %v1944 = vadd.f32 %v1710, %v1877
      %v1945 = vadd.f32 %v1711, %v1879
      %v1946 = vadd.f32 %v1712, %v1882
      %v1947 = vadd.f32 %v1713, %v1884
      %v1948 = vadd.f32 %v1714, %v1887
      %v1949 = vadd.f32 %v1715, %v1889
      %v1950 = vadd.f32 %v1716, %v1892
      %v1951 = vadd.f32 %v1717, %v1894
      %v1952 = vadd.f32 %v1718, %v1897
      %v1953 = vadd.f32 %v1719, %v1899
      %v1954 = vadd.f32 %v1720, %v1902
      %v1955 = vadd.f32 %v1721, %v1904
      %v1956 = vadd.f32 %v1722, %v1907
      %v1957 = vadd.f32 %v1723, %v1909
      %v1958 = vadd.f32 %v1724, %v1912
      %v1959 = vadd.f32 %v1725, %v1914
      %v1960 = vadd.f32 %v1726, %v1917
      %v1961 = vadd.f32 %v1727, %v1919
      %v1962 = vadd.f32 %v1728, %v1922
      %v1963 = vadd.f32 %v1729, %v1924
      %v1964 = vadd.f32 %v1730, %v1927
      %v1965 = vadd.f32 %v1731, %v1929
      %v1966 = vadd.f32 %v1732, %v1932
      %v1967 = vadd.f32 %v1733, %v1934
      %s1968 = scalar_lea.vmem [#allocation2], 48
      %v1969 = vld [vmem:[%s1968] sm:$0xff]
      %v1970 = vld [vmem:[%s1968 + $0x8] sm:$0xff]
      %v1971 = vld [vmem:[%s1968 + $0x18] sm:$0xff]
      %v1972 = vld [vmem:[%s1968 + $0x20] sm:$0xff]
      %v1973 = vld [vmem:[%s1968 + $0x30] sm:$0xff]
      %v1974 = vld [vmem:[%s1968 + $0x38] sm:$0xff]
      %v1975 = vld [vmem:[%s1968 + $0x48] sm:$0xff]
      %v1976 = vld [vmem:[%s1968 + $0x50] sm:$0xff]
      %v1977 = vld [vmem:[%s1968 + $0x60] sm:$0xff]
      %v1978 = vld [vmem:[%s1968 + $0x68] sm:$0xff]
      %v1979 = vld [vmem:[%s1968 + $0x78] sm:$0xff]
      %v1980 = vld [vmem:[%s1968 + $0x80] sm:$0xff]
      %v1981 = vld [vmem:[%s1968 + $0x90] sm:$0xff]
      %v1982 = vld [vmem:[%s1968 + $0x98] sm:$0xff]
      %v1983 = vld [vmem:[%s1968 + $0xa8] sm:$0xff]
      %v1984 = vld [vmem:[%s1968 + $0xb0] sm:$0xff]
      %v1985 = vld [vmem:[%s1968 + $0xc0] sm:$0xff]
      %v1986 = vld [vmem:[%s1968 + $0xc8] sm:$0xff]
      %v1987 = vld [vmem:[%s1968 + $0xd8] sm:$0xff]
      %v1988 = vld [vmem:[%s1968 + $0xe0] sm:$0xff]
      %v1989 = vld [vmem:[%s1968 + $0xf0] sm:$0xff]
      %v1990 = vld [vmem:[%s1968 + $0xf8] sm:$0xff]
      %v1991 = vld [vmem:[%s1968 + $0x108] sm:$0xff]
      %v1992 = vld [vmem:[%s1968 + $0x110] sm:$0xff]
      %v1993 = vld [vmem:[%s1968 + $0x120] sm:$0xff]
      %v1994 = vld [vmem:[%s1968 + $0x128] sm:$0xff]
      %v1995 = vld [vmem:[%s1968 + $0x138] sm:$0xff]
      %v1996 = vld [vmem:[%s1968 + $0x140] sm:$0xff]
      %v1997 = vld [vmem:[%s1968 + $0x150] sm:$0xff]
      %v1998 = vld [vmem:[%s1968 + $0x158] sm:$0xff]
      %v1999 = vld [vmem:[%s1968 + $0x168] sm:$0xff]
      %v2000 = vld [vmem:[%s1968 + $0x170] sm:$0xff]
      %v2001 = vpack.c.bf16 %v1970, %v1969
      %v2002 = vpack.c.bf16 %v1972, %v1971
      %v2003 = vpack.c.bf16 %v1974, %v1973
      %v2004 = vpack.c.bf16 %v1976, %v1975
      %v2005 = vpack.c.bf16 %v1978, %v1977
      %v2006 = vpack.c.bf16 %v1980, %v1979
      %v2007 = vpack.c.bf16 %v1982, %v1981
      %v2008 = vpack.c.bf16 %v1984, %v1983
      %v2009 = vpack.c.bf16 %v1986, %v1985
      %v2010 = vpack.c.bf16 %v1988, %v1987
      %v2011 = vpack.c.bf16 %v1990, %v1989
      %v2012 = vpack.c.bf16 %v1992, %v1991
      %v2013 = vpack.c.bf16 %v1994, %v1993
      %v2014 = vpack.c.bf16 %v1996, %v1995
      %v2015 = vpack.c.bf16 %v1998, %v1997
      %v2016 = vpack.c.bf16 %v2000, %v1999
      %s2017 = scalar_lea.vmem %s3, 384
      %v2018 = vld [vmem:[%s2017] sm:$0xf]
      %v2019 = vld [vmem:[%s2017 + $0x4] sm:$0xf]
      %v2020 = vld [vmem:[%s2017 + $0x8] sm:$0xf]
      %v2021 = vld [vmem:[%s2017 + $0xc] sm:$0xf]
      %v2022 = vld [vmem:[%s2017 + $0x10] sm:$0xf]
      %v2023 = vld [vmem:[%s2017 + $0x14] sm:$0xf]
      %v2024 = vld [vmem:[%s2017 + $0x18] sm:$0xf]
      %v2025 = vld [vmem:[%s2017 + $0x1c] sm:$0xf]
      %v2026 = vld [vmem:[%s2017 + $0x20] sm:$0xf]
      %v2027 = vld [vmem:[%s2017 + $0x24] sm:$0xf]
      %v2028 = vld [vmem:[%s2017 + $0x28] sm:$0xf]
      %v2029 = vld [vmem:[%s2017 + $0x2c] sm:$0xf]
      %v2030 = vld [vmem:[%s2017 + $0x30] sm:$0xf]
      %v2031 = vld [vmem:[%s2017 + $0x34] sm:$0xf]
      %v2032 = vld [vmem:[%s2017 + $0x38] sm:$0xf]
      %v2033 = vld [vmem:[%s2017 + $0x3c] sm:$0xf]
      %v2050 = vunpack.c.l.b16 %v2018
      %v2051 = vunpack.c.l.b16 %v2019
      %v2052 = vunpack.c.l.b16 %v2020
      %v2053 = vunpack.c.l.b16 %v2021
      %v2054 = vunpack.c.l.b16 %v2022
      %v2055 = vunpack.c.l.b16 %v2023
      %v2056 = vunpack.c.l.b16 %v2024
      %v2057 = vunpack.c.l.b16 %v2025
      %v2058 = vunpack.c.l.b16 %v2026
      %v2059 = vunpack.c.l.b16 %v2027
      %v2060 = vunpack.c.l.b16 %v2028
      %v2061 = vunpack.c.l.b16 %v2029
      %v2062 = vunpack.c.l.b16 %v2030
      %v2063 = vunpack.c.l.b16 %v2031
      %v2064 = vunpack.c.l.b16 %v2032
      %v2065 = vunpack.c.l.b16 %v2033
      %v2066 = vpack.c.b16 %v2051, %v2050
      %v2067 = vpack.c.b16 %v2053, %v2052
      %v2068 = vpack.c.b16 %v2055, %v2054
      %v2069 = vpack.c.b16 %v2057, %v2056
      %v2070 = vpack.c.b16 %v2059, %v2058
      %v2071 = vpack.c.b16 %v2061, %v2060
      %v2072 = vpack.c.b16 %v2063, %v2062
      %v2073 = vpack.c.b16 %v2065, %v2064
      %2082 = vmatpush.bf16.msra.mxu0 %v2073
      %2083 = vmatpush.bf16.msra.mxu0 %v2072
      %2084 = vmatpush.bf16.msra.mxu0 %v2071
      %2085 = vmatpush.bf16.msra.mxu0 %v2070
      %2086 = vmatpush.bf16.msra.mxu0 %v2069
      %2087 = vmatpush.bf16.msra.mxu0 %v2068
      %2088 = vmatpush.bf16.msra.mxu0 %v2067
      %2089 = vmatpush.bf16.msra.mxu0 %v2066
      %2090 = vmatmul.bf16.gmra.mxu0 %v2001
      %v2091 = vpop.f32.mrf.mxu0
      %v2092 = vadd.f32 0.0, %v2091
      %v2093 = vpop.f32.mrf.mxu0
      %v2094 = vadd.f32 0.0, %v2093
      %2095 = vmatmul.bf16.gmra.mxu0 %v2002
      %v2096 = vpop.f32.mrf.mxu0
      %v2097 = vadd.f32 0.0, %v2096
      %v2098 = vpop.f32.mrf.mxu0
      %v2099 = vadd.f32 0.0, %v2098
      %2100 = vmatmul.bf16.gmra.mxu0 %v2003
      %v2101 = vpop.f32.mrf.mxu0
      %v2102 = vadd.f32 0.0, %v2101
      %v2103 = vpop.f32.mrf.mxu0
      %v2104 = vadd.f32 0.0, %v2103
      %2105 = vmatmul.bf16.gmra.mxu0 %v2004
      %v2106 = vpop.f32.mrf.mxu0
      %v2107 = vadd.f32 0.0, %v2106
      %v2108 = vpop.f32.mrf.mxu0
      %v2109 = vadd.f32 0.0, %v2108
      %2110 = vmatmul.bf16.gmra.mxu0 %v2005
      %v2111 = vpop.f32.mrf.mxu0
      %v2112 = vadd.f32 0.0, %v2111
      %v2113 = vpop.f32.mrf.mxu0
      %v2114 = vadd.f32 0.0, %v2113
      %2115 = vmatmul.bf16.gmra.mxu0 %v2006
      %v2116 = vpop.f32.mrf.mxu0
      %v2117 = vadd.f32 0.0, %v2116
      %v2118 = vpop.f32.mrf.mxu0
      %v2119 = vadd.f32 0.0, %v2118
      %2120 = vmatmul.bf16.gmra.mxu0 %v2007
      %v2121 = vpop.f32.mrf.mxu0
      %v2122 = vadd.f32 0.0, %v2121
      %v2123 = vpop.f32.mrf.mxu0
      %v2124 = vadd.f32 0.0, %v2123
      %2125 = vmatmul.bf16.gmra.mxu0 %v2008
      %v2126 = vpop.f32.mrf.mxu0
      %v2127 = vadd.f32 0.0, %v2126
      %v2128 = vpop.f32.mrf.mxu0
      %v2129 = vadd.f32 0.0, %v2128
      %2130 = vmatmul.bf16.gmra.mxu0 %v2009
      %v2131 = vpop.f32.mrf.mxu0
      %v2132 = vadd.f32 0.0, %v2131
      %v2133 = vpop.f32.mrf.mxu0
      %v2134 = vadd.f32 0.0, %v2133
      %2135 = vmatmul.bf16.gmra.mxu0 %v2010
      %v2136 = vpop.f32.mrf.mxu0
      %v2137 = vadd.f32 0.0, %v2136
      %v2138 = vpop.f32.mrf.mxu0
      %v2139 = vadd.f32 0.0, %v2138
      %2140 = vmatmul.bf16.gmra.mxu0 %v2011
      %v2141 = vpop.f32.mrf.mxu0
      %v2142 = vadd.f32 0.0, %v2141
      %v2143 = vpop.f32.mrf.mxu0
      %v2144 = vadd.f32 0.0, %v2143
      %2145 = vmatmul.bf16.gmra.mxu0 %v2012
      %v2146 = vpop.f32.mrf.mxu0
      %v2147 = vadd.f32 0.0, %v2146
      %v2148 = vpop.f32.mrf.mxu0
      %v2149 = vadd.f32 0.0, %v2148
      %2150 = vmatmul.bf16.gmra.mxu0 %v2013
      %v2151 = vpop.f32.mrf.mxu0
      %v2152 = vadd.f32 0.0, %v2151
      %v2153 = vpop.f32.mrf.mxu0
      %v2154 = vadd.f32 0.0, %v2153
      %2155 = vmatmul.bf16.gmra.mxu0 %v2014
      %v2156 = vpop.f32.mrf.mxu0
      %v2157 = vadd.f32 0.0, %v2156
      %v2158 = vpop.f32.mrf.mxu0
      %v2159 = vadd.f32 0.0, %v2158
      %2160 = vmatmul.bf16.gmra.mxu0 %v2015
      %v2161 = vpop.f32.mrf.mxu0
      %v2162 = vadd.f32 0.0, %v2161
      %v2163 = vpop.f32.mrf.mxu0
      %v2164 = vadd.f32 0.0, %v2163
      %2165 = vmatmul.bf16.gmra.mxu0 %v2016
      %v2166 = vpop.f32.mrf.mxu0
      %v2167 = vadd.f32 0.0, %v2166
      %v2168 = vpop.f32.mrf.mxu0
      %v2169 = vadd.f32 0.0, %v2168
      %2170 = vdwg.mxu0
      %v2171 = vadd.f32 %v1936, %v2092
      %v2172 = vadd.f32 %v1937, %v2094
      %v2173 = vadd.f32 %v1938, %v2097
      %v2174 = vadd.f32 %v1939, %v2099
      %v2175 = vadd.f32 %v1940, %v2102
      %v2176 = vadd.f32 %v1941, %v2104
      %v2177 = vadd.f32 %v1942, %v2107
      %v2178 = vadd.f32 %v1943, %v2109
      %v2179 = vadd.f32 %v1944, %v2112
      %v2180 = vadd.f32 %v1945, %v2114
      %v2181 = vadd.f32 %v1946, %v2117
      %v2182 = vadd.f32 %v1947, %v2119
      %v2183 = vadd.f32 %v1948, %v2122
      %v2184 = vadd.f32 %v1949, %v2124
      %v2185 = vadd.f32 %v1950, %v2127
      %v2186 = vadd.f32 %v1951, %v2129
      %v2187 = vadd.f32 %v1952, %v2132
      %v2188 = vadd.f32 %v1953, %v2134
      %v2189 = vadd.f32 %v1954, %v2137
      %v2190 = vadd.f32 %v1955, %v2139
      %v2191 = vadd.f32 %v1956, %v2142
      %v2192 = vadd.f32 %v1957, %v2144
      %v2193 = vadd.f32 %v1958, %v2147
      %v2194 = vadd.f32 %v1959, %v2149
      %v2195 = vadd.f32 %v1960, %v2152
      %v2196 = vadd.f32 %v1961, %v2154
      %v2197 = vadd.f32 %v1962, %v2157
      %v2198 = vadd.f32 %v1963, %v2159
      %v2199 = vadd.f32 %v1964, %v2162
      %v2200 = vadd.f32 %v1965, %v2164
      %v2201 = vadd.f32 %v1966, %v2167
      %v2202 = vadd.f32 %v1967, %v2169
      %v2203 = vld [vmem:[%s1968 + $0x1] sm:$0xff]
      %v2204 = vld [vmem:[%s1968 + $0x9] sm:$0xff]
      %v2205 = vld [vmem:[%s1968 + $0x19] sm:$0xff]
      %v2206 = vld [vmem:[%s1968 + $0x21] sm:$0xff]
      %v2207 = vld [vmem:[%s1968 + $0x31] sm:$0xff]
      %v2208 = vld [vmem:[%s1968 + $0x39] sm:$0xff]
      %v2209 = vld [vmem:[%s1968 + $0x49] sm:$0xff]
      %v2210 = vld [vmem:[%s1968 + $0x51] sm:$0xff]
      %v2211 = vld [vmem:[%s1968 + $0x61] sm:$0xff]
      %v2212 = vld [vmem:[%s1968 + $0x69] sm:$0xff]
      %v2213 = vld [vmem:[%s1968 + $0x79] sm:$0xff]
      %v2214 = vld [vmem:[%s1968 + $0x81] sm:$0xff]
      %v2215 = vld [vmem:[%s1968 + $0x91] sm:$0xff]
      %v2216 = vld [vmem:[%s1968 + $0x99] sm:$0xff]
      %v2217 = vld [vmem:[%s1968 + $0xa9] sm:$0xff]
      %v2218 = vld [vmem:[%s1968 + $0xb1] sm:$0xff]
      %v2219 = vld [vmem:[%s1968 + $0xc1] sm:$0xff]
      %v2220 = vld [vmem:[%s1968 + $0xc9] sm:$0xff]
      %v2221 = vld [vmem:[%s1968 + $0xd9] sm:$0xff]
      %v2222 = vld [vmem:[%s1968 + $0xe1] sm:$0xff]
      %v2223 = vld [vmem:[%s1968 + $0xf1] sm:$0xff]
      %v2224 = vld [vmem:[%s1968 + $0xf9] sm:$0xff]
      %v2225 = vld [vmem:[%s1968 + $0x109] sm:$0xff]
      %v2226 = vld [vmem:[%s1968 + $0x111] sm:$0xff]
      %v2227 = vld [vmem:[%s1968 + $0x121] sm:$0xff]
      %v2228 = vld [vmem:[%s1968 + $0x129] sm:$0xff]
      %v2229 = vld [vmem:[%s1968 + $0x139] sm:$0xff]
      %v2230 = vld [vmem:[%s1968 + $0x141] sm:$0xff]
      %v2231 = vld [vmem:[%s1968 + $0x151] sm:$0xff]
      %v2232 = vld [vmem:[%s1968 + $0x159] sm:$0xff]
      %v2233 = vld [vmem:[%s1968 + $0x169] sm:$0xff]
      %v2234 = vld [vmem:[%s1968 + $0x171] sm:$0xff]
      %v2235 = vpack.c.bf16 %v2204, %v2203
      %v2236 = vpack.c.bf16 %v2206, %v2205
      %v2237 = vpack.c.bf16 %v2208, %v2207
      %v2238 = vpack.c.bf16 %v2210, %v2209
      %v2239 = vpack.c.bf16 %v2212, %v2211
      %v2240 = vpack.c.bf16 %v2214, %v2213
      %v2241 = vpack.c.bf16 %v2216, %v2215
      %v2242 = vpack.c.bf16 %v2218, %v2217
      %v2243 = vpack.c.bf16 %v2220, %v2219
      %v2244 = vpack.c.bf16 %v2222, %v2221
      %v2245 = vpack.c.bf16 %v2224, %v2223
      %v2246 = vpack.c.bf16 %v2226, %v2225
      %v2247 = vpack.c.bf16 %v2228, %v2227
      %v2248 = vpack.c.bf16 %v2230, %v2229
      %v2249 = vpack.c.bf16 %v2232, %v2231
      %v2250 = vpack.c.bf16 %v2234, %v2233
      %s2251 = scalar_lea.vmem %s3, 448
      %v2252 = vld [vmem:[%s2251] sm:$0xf]
      %v2253 = vld [vmem:[%s2251 + $0x4] sm:$0xf]
      %v2254 = vld [vmem:[%s2251 + $0x8] sm:$0xf]
      %v2255 = vld [vmem:[%s2251 + $0xc] sm:$0xf]
      %v2256 = vld [vmem:[%s2251 + $0x10] sm:$0xf]
      %v2257 = vld [vmem:[%s2251 + $0x14] sm:$0xf]
      %v2258 = vld [vmem:[%s2251 + $0x18] sm:$0xf]
      %v2259 = vld [vmem:[%s2251 + $0x1c] sm:$0xf]
      %v2260 = vld [vmem:[%s2251 + $0x20] sm:$0xf]
      %v2261 = vld [vmem:[%s2251 + $0x24] sm:$0xf]
      %v2262 = vld [vmem:[%s2251 + $0x28] sm:$0xf]
      %v2263 = vld [vmem:[%s2251 + $0x2c] sm:$0xf]
      %v2264 = vld [vmem:[%s2251 + $0x30] sm:$0xf]
      %v2265 = vld [vmem:[%s2251 + $0x34] sm:$0xf]
      %v2266 = vld [vmem:[%s2251 + $0x38] sm:$0xf]
      %v2267 = vld [vmem:[%s2251 + $0x3c] sm:$0xf]
      %v2284 = vunpack.c.l.b16 %v2252
      %v2285 = vunpack.c.l.b16 %v2253
      %v2286 = vunpack.c.l.b16 %v2254
      %v2287 = vunpack.c.l.b16 %v2255
      %v2288 = vunpack.c.l.b16 %v2256
      %v2289 = vunpack.c.l.b16 %v2257
      %v2290 = vunpack.c.l.b16 %v2258
      %v2291 = vunpack.c.l.b16 %v2259
      %v2292 = vunpack.c.l.b16 %v2260
      %v2293 = vunpack.c.l.b16 %v2261
      %v2294 = vunpack.c.l.b16 %v2262
      %v2295 = vunpack.c.l.b16 %v2263
      %v2296 = vunpack.c.l.b16 %v2264
      %v2297 = vunpack.c.l.b16 %v2265
      %v2298 = vunpack.c.l.b16 %v2266
      %v2299 = vunpack.c.l.b16 %v2267
      %v2300 = vpack.c.b16 %v2285, %v2284
      %v2301 = vpack.c.b16 %v2287, %v2286
      %v2302 = vpack.c.b16 %v2289, %v2288
      %v2303 = vpack.c.b16 %v2291, %v2290
      %v2304 = vpack.c.b16 %v2293, %v2292
      %v2305 = vpack.c.b16 %v2295, %v2294
      %v2306 = vpack.c.b16 %v2297, %v2296
      %v2307 = vpack.c.b16 %v2299, %v2298
      %2316 = vmatpush.bf16.msra.mxu0 %v2307
      %2317 = vmatpush.bf16.msra.mxu0 %v2306
      %2318 = vmatpush.bf16.msra.mxu0 %v2305
      %2319 = vmatpush.bf16.msra.mxu0 %v2304
      %2320 = vmatpush.bf16.msra.mxu0 %v2303
      %2321 = vmatpush.bf16.msra.mxu0 %v2302
      %2322 = vmatpush.bf16.msra.mxu0 %v2301
      %2323 = vmatpush.bf16.msra.mxu0 %v2300
      %2324 = vmatmul.bf16.gmra.mxu0 %v2235
      %v2325 = vpop.f32.mrf.mxu0
      %v2326 = vadd.f32 0.0, %v2325
      %v2327 = vpop.f32.mrf.mxu0
      %v2328 = vadd.f32 0.0, %v2327
      %2329 = vmatmul.bf16.gmra.mxu0 %v2236
      %v2330 = vpop.f32.mrf.mxu0
      %v2331 = vadd.f32 0.0, %v2330
      %v2332 = vpop.f32.mrf.mxu0
      %v2333 = vadd.f32 0.0, %v2332
      %2334 = vmatmul.bf16.gmra.mxu0 %v2237
      %v2335 = vpop.f32.mrf.mxu0
      %v2336 = vadd.f32 0.0, %v2335
      %v2337 = vpop.f32.mrf.mxu0
      %v2338 = vadd.f32 0.0, %v2337
      %2339 = vmatmul.bf16.gmra.mxu0 %v2238
      %v2340 = vpop.f32.mrf.mxu0
      %v2341 = vadd.f32 0.0, %v2340
      %v2342 = vpop.f32.mrf.mxu0
      %v2343 = vadd.f32 0.0, %v2342
      %2344 = vmatmul.bf16.gmra.mxu0 %v2239
      %v2345 = vpop.f32.mrf.mxu0
      %v2346 = vadd.f32 0.0, %v2345
      %v2347 = vpop.f32.mrf.mxu0
      %v2348 = vadd.f32 0.0, %v2347
      %2349 = vmatmul.bf16.gmra.mxu0 %v2240
      %v2350 = vpop.f32.mrf.mxu0
      %v2351 = vadd.f32 0.0, %v2350
      %v2352 = vpop.f32.mrf.mxu0
      %v2353 = vadd.f32 0.0, %v2352
      %2354 = vmatmul.bf16.gmra.mxu0 %v2241
      %v2355 = vpop.f32.mrf.mxu0
      %v2356 = vadd.f32 0.0, %v2355
      %v2357 = vpop.f32.mrf.mxu0
      %v2358 = vadd.f32 0.0, %v2357
      %2359 = vmatmul.bf16.gmra.mxu0 %v2242
      %v2360 = vpop.f32.mrf.mxu0
      %v2361 = vadd.f32 0.0, %v2360
      %v2362 = vpop.f32.mrf.mxu0
      %v2363 = vadd.f32 0.0, %v2362
      %2364 = vmatmul.bf16.gmra.mxu0 %v2243
      %v2365 = vpop.f32.mrf.mxu0
      %v2366 = vadd.f32 0.0, %v2365
      %v2367 = vpop.f32.mrf.mxu0
      %v2368 = vadd.f32 0.0, %v2367
      %2369 = vmatmul.bf16.gmra.mxu0 %v2244
      %v2370 = vpop.f32.mrf.mxu0
      %v2371 = vadd.f32 0.0, %v2370
      %v2372 = vpop.f32.mrf.mxu0
      %v2373 = vadd.f32 0.0, %v2372
      %2374 = vmatmul.bf16.gmra.mxu0 %v2245
      %v2375 = vpop.f32.mrf.mxu0
      %v2376 = vadd.f32 0.0, %v2375
      %v2377 = vpop.f32.mrf.mxu0
      %v2378 = vadd.f32 0.0, %v2377
      %2379 = vmatmul.bf16.gmra.mxu0 %v2246
      %v2380 = vpop.f32.mrf.mxu0
      %v2381 = vadd.f32 0.0, %v2380
      %v2382 = vpop.f32.mrf.mxu0
      %v2383 = vadd.f32 0.0, %v2382
      %2384 = vmatmul.bf16.gmra.mxu0 %v2247
      %v2385 = vpop.f32.mrf.mxu0
      %v2386 = vadd.f32 0.0, %v2385
      %v2387 = vpop.f32.mrf.mxu0
      %v2388 = vadd.f32 0.0, %v2387
      %2389 = vmatmul.bf16.gmra.mxu0 %v2248
      %v2390 = vpop.f32.mrf.mxu0
      %v2391 = vadd.f32 0.0, %v2390
      %v2392 = vpop.f32.mrf.mxu0
      %v2393 = vadd.f32 0.0, %v2392
      %2394 = vmatmul.bf16.gmra.mxu0 %v2249
      %v2395 = vpop.f32.mrf.mxu0
      %v2396 = vadd.f32 0.0, %v2395
      %v2397 = vpop.f32.mrf.mxu0
      %v2398 = vadd.f32 0.0, %v2397
      %2399 = vmatmul.bf16.gmra.mxu0 %v2250
      %v2400 = vpop.f32.mrf.mxu0
      %v2401 = vadd.f32 0.0, %v2400
      %v2402 = vpop.f32.mrf.mxu0
      %v2403 = vadd.f32 0.0, %v2402
      %2404 = vdwg.mxu0
      %v2405 = vadd.f32 %v2171, %v2326
      %v2406 = vadd.f32 %v2172, %v2328
      %v2407 = vadd.f32 %v2173, %v2331
      %v2408 = vadd.f32 %v2174, %v2333
      %v2409 = vadd.f32 %v2175, %v2336
      %v2410 = vadd.f32 %v2176, %v2338
      %v2411 = vadd.f32 %v2177, %v2341
      %v2412 = vadd.f32 %v2178, %v2343
      %v2413 = vadd.f32 %v2179, %v2346
      %v2414 = vadd.f32 %v2180, %v2348
      %v2415 = vadd.f32 %v2181, %v2351
      %v2416 = vadd.f32 %v2182, %v2353
      %v2417 = vadd.f32 %v2183, %v2356
      %v2418 = vadd.f32 %v2184, %v2358
      %v2419 = vadd.f32 %v2185, %v2361
      %v2420 = vadd.f32 %v2186, %v2363
      %v2421 = vadd.f32 %v2187, %v2366
      %v2422 = vadd.f32 %v2188, %v2368
      %v2423 = vadd.f32 %v2189, %v2371
      %v2424 = vadd.f32 %v2190, %v2373
      %v2425 = vadd.f32 %v2191, %v2376
      %v2426 = vadd.f32 %v2192, %v2378
      %v2427 = vadd.f32 %v2193, %v2381
      %v2428 = vadd.f32 %v2194, %v2383
      %v2429 = vadd.f32 %v2195, %v2386
      %v2430 = vadd.f32 %v2196, %v2388
      %v2431 = vadd.f32 %v2197, %v2391
      %v2432 = vadd.f32 %v2198, %v2393
      %v2433 = vadd.f32 %v2199, %v2396
      %v2434 = vadd.f32 %v2200, %v2398
      %v2435 = vadd.f32 %v2201, %v2401
      %v2436 = vadd.f32 %v2202, %v2403
      %v2437 = vld [vmem:[%s1968 + $0x2] sm:$0xff]
      %v2438 = vld [vmem:[%s1968 + $0xa] sm:$0xff]
      %v2439 = vld [vmem:[%s1968 + $0x1a] sm:$0xff]
      %v2440 = vld [vmem:[%s1968 + $0x22] sm:$0xff]
      %v2441 = vld [vmem:[%s1968 + $0x32] sm:$0xff]
      %v2442 = vld [vmem:[%s1968 + $0x3a] sm:$0xff]
      %v2443 = vld [vmem:[%s1968 + $0x4a] sm:$0xff]
      %v2444 = vld [vmem:[%s1968 + $0x52] sm:$0xff]
      %v2445 = vld [vmem:[%s1968 + $0x62] sm:$0xff]
      %v2446 = vld [vmem:[%s1968 + $0x6a] sm:$0xff]
      %v2447 = vld [vmem:[%s1968 + $0x7a] sm:$0xff]
      %v2448 = vld [vmem:[%s1968 + $0x82] sm:$0xff]
      %v2449 = vld [vmem:[%s1968 + $0x92] sm:$0xff]
      %v2450 = vld [vmem:[%s1968 + $0x9a] sm:$0xff]
      %v2451 = vld [vmem:[%s1968 + $0xaa] sm:$0xff]
      %v2452 = vld [vmem:[%s1968 + $0xb2] sm:$0xff]
      %v2453 = vld [vmem:[%s1968 + $0xc2] sm:$0xff]
      %v2454 = vld [vmem:[%s1968 + $0xca] sm:$0xff]
      %v2455 = vld [vmem:[%s1968 + $0xda] sm:$0xff]
      %v2456 = vld [vmem:[%s1968 + $0xe2] sm:$0xff]
      %v2457 = vld [vmem:[%s1968 + $0xf2] sm:$0xff]
      %v2458 = vld [vmem:[%s1968 + $0xfa] sm:$0xff]
      %v2459 = vld [vmem:[%s1968 + $0x10a] sm:$0xff]
      %v2460 = vld [vmem:[%s1968 + $0x112] sm:$0xff]
      %v2461 = vld [vmem:[%s1968 + $0x122] sm:$0xff]
      %v2462 = vld [vmem:[%s1968 + $0x12a] sm:$0xff]
      %v2463 = vld [vmem:[%s1968 + $0x13a] sm:$0xff]
      %v2464 = vld [vmem:[%s1968 + $0x142] sm:$0xff]
      %v2465 = vld [vmem:[%s1968 + $0x152] sm:$0xff]
      %v2466 = vld [vmem:[%s1968 + $0x15a] sm:$0xff]
      %v2467 = vld [vmem:[%s1968 + $0x16a] sm:$0xff]
      %v2468 = vld [vmem:[%s1968 + $0x172] sm:$0xff]
      %v2469 = vpack.c.bf16 %v2438, %v2437
      %v2470 = vpack.c.bf16 %v2440, %v2439
      %v2471 = vpack.c.bf16 %v2442, %v2441
      %v2472 = vpack.c.bf16 %v2444, %v2443
      %v2473 = vpack.c.bf16 %v2446, %v2445
      %v2474 = vpack.c.bf16 %v2448, %v2447
      %v2475 = vpack.c.bf16 %v2450, %v2449
      %v2476 = vpack.c.bf16 %v2452, %v2451
      %v2477 = vpack.c.bf16 %v2454, %v2453
      %v2478 = vpack.c.bf16 %v2456, %v2455
      %v2479 = vpack.c.bf16 %v2458, %v2457
      %v2480 = vpack.c.bf16 %v2460, %v2459
      %v2481 = vpack.c.bf16 %v2462, %v2461
      %v2482 = vpack.c.bf16 %v2464, %v2463
      %v2483 = vpack.c.bf16 %v2466, %v2465
      %v2484 = vpack.c.bf16 %v2468, %v2467
      %s2485 = scalar_lea.vmem %s3, 512
      %v2486 = vld [vmem:[%s2485] sm:$0xf]
      %v2487 = vld [vmem:[%s2485 + $0x4] sm:$0xf]
      %v2488 = vld [vmem:[%s2485 + $0x8] sm:$0xf]
      %v2489 = vld [vmem:[%s2485 + $0xc] sm:$0xf]
      %v2490 = vld [vmem:[%s2485 + $0x10] sm:$0xf]
      %v2491 = vld [vmem:[%s2485 + $0x14] sm:$0xf]
      %v2492 = vld [vmem:[%s2485 + $0x18] sm:$0xf]
      %v2493 = vld [vmem:[%s2485 + $0x1c] sm:$0xf]
      %v2494 = vld [vmem:[%s2485 + $0x20] sm:$0xf]
      %v2495 = vld [vmem:[%s2485 + $0x24] sm:$0xf]
      %v2496 = vld [vmem:[%s2485 + $0x28] sm:$0xf]
      %v2497 = vld [vmem:[%s2485 + $0x2c] sm:$0xf]
      %v2498 = vld [vmem:[%s2485 + $0x30] sm:$0xf]
      %v2499 = vld [vmem:[%s2485 + $0x34] sm:$0xf]
      %v2500 = vld [vmem:[%s2485 + $0x38] sm:$0xf]
      %v2501 = vld [vmem:[%s2485 + $0x3c] sm:$0xf]
      %v2518 = vunpack.c.l.b16 %v2486
      %v2519 = vunpack.c.l.b16 %v2487
      %v2520 = vunpack.c.l.b16 %v2488
      %v2521 = vunpack.c.l.b16 %v2489
      %v2522 = vunpack.c.l.b16 %v2490
      %v2523 = vunpack.c.l.b16 %v2491
      %v2524 = vunpack.c.l.b16 %v2492
      %v2525 = vunpack.c.l.b16 %v2493
      %v2526 = vunpack.c.l.b16 %v2494
      %v2527 = vunpack.c.l.b16 %v2495
      %v2528 = vunpack.c.l.b16 %v2496
      %v2529 = vunpack.c.l.b16 %v2497
      %v2530 = vunpack.c.l.b16 %v2498
      %v2531 = vunpack.c.l.b16 %v2499
      %v2532 = vunpack.c.l.b16 %v2500
      %v2533 = vunpack.c.l.b16 %v2501
      %v2534 = vpack.c.b16 %v2519, %v2518
      %v2535 = vpack.c.b16 %v2521, %v2520
      %v2536 = vpack.c.b16 %v2523, %v2522
      %v2537 = vpack.c.b16 %v2525, %v2524
      %v2538 = vpack.c.b16 %v2527, %v2526
      %v2539 = vpack.c.b16 %v2529, %v2528
      %v2540 = vpack.c.b16 %v2531, %v2530
      %v2541 = vpack.c.b16 %v2533, %v2532
      %2550 = vmatpush.bf16.msra.mxu0 %v2541
      %2551 = vmatpush.bf16.msra.mxu0 %v2540
      %2552 = vmatpush.bf16.msra.mxu0 %v2539
      %2553 = vmatpush.bf16.msra.mxu0 %v2538
      %2554 = vmatpush.bf16.msra.mxu0 %v2537
      %2555 = vmatpush.bf16.msra.mxu0 %v2536
      %2556 = vmatpush.bf16.msra.mxu0 %v2535
      %2557 = vmatpush.bf16.msra.mxu0 %v2534
      %2558 = vmatmul.bf16.gmra.mxu0 %v2469
      %v2559 = vpop.f32.mrf.mxu0
      %v2560 = vadd.f32 0.0, %v2559
      %v2561 = vpop.f32.mrf.mxu0
      %v2562 = vadd.f32 0.0, %v2561
      %2563 = vmatmul.bf16.gmra.mxu0 %v2470
      %v2564 = vpop.f32.mrf.mxu0
      %v2565 = vadd.f32 0.0, %v2564
      %v2566 = vpop.f32.mrf.mxu0
      %v2567 = vadd.f32 0.0, %v2566
      %2568 = vmatmul.bf16.gmra.mxu0 %v2471
      %v2569 = vpop.f32.mrf.mxu0
      %v2570 = vadd.f32 0.0, %v2569
      %v2571 = vpop.f32.mrf.mxu0
      %v2572 = vadd.f32 0.0, %v2571
      %2573 = vmatmul.bf16.gmra.mxu0 %v2472
      %v2574 = vpop.f32.mrf.mxu0
      %v2575 = vadd.f32 0.0, %v2574
      %v2576 = vpop.f32.mrf.mxu0
      %v2577 = vadd.f32 0.0, %v2576
      %2578 = vmatmul.bf16.gmra.mxu0 %v2473
      %v2579 = vpop.f32.mrf.mxu0
      %v2580 = vadd.f32 0.0, %v2579
      %v2581 = vpop.f32.mrf.mxu0
      %v2582 = vadd.f32 0.0, %v2581
      %2583 = vmatmul.bf16.gmra.mxu0 %v2474
      %v2584 = vpop.f32.mrf.mxu0
      %v2585 = vadd.f32 0.0, %v2584
      %v2586 = vpop.f32.mrf.mxu0
      %v2587 = vadd.f32 0.0, %v2586
      %2588 = vmatmul.bf16.gmra.mxu0 %v2475
      %v2589 = vpop.f32.mrf.mxu0
      %v2590 = vadd.f32 0.0, %v2589
      %v2591 = vpop.f32.mrf.mxu0
      %v2592 = vadd.f32 0.0, %v2591
      %2593 = vmatmul.bf16.gmra.mxu0 %v2476
      %v2594 = vpop.f32.mrf.mxu0
      %v2595 = vadd.f32 0.0, %v2594
      %v2596 = vpop.f32.mrf.mxu0
      %v2597 = vadd.f32 0.0, %v2596
      %2598 = vmatmul.bf16.gmra.mxu0 %v2477
      %v2599 = vpop.f32.mrf.mxu0
      %v2600 = vadd.f32 0.0, %v2599
      %v2601 = vpop.f32.mrf.mxu0
      %v2602 = vadd.f32 0.0, %v2601
      %2603 = vmatmul.bf16.gmra.mxu0 %v2478
      %v2604 = vpop.f32.mrf.mxu0
      %v2605 = vadd.f32 0.0, %v2604
      %v2606 = vpop.f32.mrf.mxu0
      %v2607 = vadd.f32 0.0, %v2606
      %2608 = vmatmul.bf16.gmra.mxu0 %v2479
      %v2609 = vpop.f32.mrf.mxu0
      %v2610 = vadd.f32 0.0, %v2609
      %v2611 = vpop.f32.mrf.mxu0
      %v2612 = vadd.f32 0.0, %v2611
      %2613 = vmatmul.bf16.gmra.mxu0 %v2480
      %v2614 = vpop.f32.mrf.mxu0
      %v2615 = vadd.f32 0.0, %v2614
      %v2616 = vpop.f32.mrf.mxu0
      %v2617 = vadd.f32 0.0, %v2616
      %2618 = vmatmul.bf16.gmra.mxu0 %v2481
      %v2619 = vpop.f32.mrf.mxu0
      %v2620 = vadd.f32 0.0, %v2619
      %v2621 = vpop.f32.mrf.mxu0
      %v2622 = vadd.f32 0.0, %v2621
      %2623 = vmatmul.bf16.gmra.mxu0 %v2482
      %v2624 = vpop.f32.mrf.mxu0
      %v2625 = vadd.f32 0.0, %v2624
      %v2626 = vpop.f32.mrf.mxu0
      %v2627 = vadd.f32 0.0, %v2626
      %2628 = vmatmul.bf16.gmra.mxu0 %v2483
      %v2629 = vpop.f32.mrf.mxu0
      %v2630 = vadd.f32 0.0, %v2629
      %v2631 = vpop.f32.mrf.mxu0
      %v2632 = vadd.f32 0.0, %v2631
      %2633 = vmatmul.bf16.gmra.mxu0 %v2484
      %v2634 = vpop.f32.mrf.mxu0
      %v2635 = vadd.f32 0.0, %v2634
      %v2636 = vpop.f32.mrf.mxu0
      %v2637 = vadd.f32 0.0, %v2636
      %2638 = vdwg.mxu0
      %v2639 = vadd.f32 %v2405, %v2560
      %v2640 = vadd.f32 %v2406, %v2562
      %v2641 = vadd.f32 %v2407, %v2565
      %v2642 = vadd.f32 %v2408, %v2567
      %v2643 = vadd.f32 %v2409, %v2570
      %v2644 = vadd.f32 %v2410, %v2572
      %v2645 = vadd.f32 %v2411, %v2575
      %v2646 = vadd.f32 %v2412, %v2577
      %v2647 = vadd.f32 %v2413, %v2580
      %v2648 = vadd.f32 %v2414, %v2582
      %v2649 = vadd.f32 %v2415, %v2585
      %v2650 = vadd.f32 %v2416, %v2587
      %v2651 = vadd.f32 %v2417, %v2590
      %v2652 = vadd.f32 %v2418, %v2592
      %v2653 = vadd.f32 %v2419, %v2595
      %v2654 = vadd.f32 %v2420, %v2597
      %v2655 = vadd.f32 %v2421, %v2600
      %v2656 = vadd.f32 %v2422, %v2602
      %v2657 = vadd.f32 %v2423, %v2605
      %v2658 = vadd.f32 %v2424, %v2607
      %v2659 = vadd.f32 %v2425, %v2610
      %v2660 = vadd.f32 %v2426, %v2612
      %v2661 = vadd.f32 %v2427, %v2615
      %v2662 = vadd.f32 %v2428, %v2617
      %v2663 = vadd.f32 %v2429, %v2620
      %v2664 = vadd.f32 %v2430, %v2622
      %v2665 = vadd.f32 %v2431, %v2625
      %v2666 = vadd.f32 %v2432, %v2627
      %v2667 = vadd.f32 %v2433, %v2630
      %v2668 = vadd.f32 %v2434, %v2632
      %v2669 = vadd.f32 %v2435, %v2635
      %v2670 = vadd.f32 %v2436, %v2637
      %v2671 = vld [vmem:[%s4] sm:$0x1]
      %v2673 = vperm.slane %v2671, 0
      %v2675 = vadd.f32 %v2639, %v2673
      %v2676 = vadd.f32 %v2640, %v2673
      %v2677 = vadd.f32 %v2641, %v2673
      %v2678 = vadd.f32 %v2642, %v2673
      %v2679 = vadd.f32 %v2643, %v2673
      %v2680 = vadd.f32 %v2644, %v2673
      %v2681 = vadd.f32 %v2645, %v2673
      %v2682 = vadd.f32 %v2646, %v2673
      %v2683 = vadd.f32 %v2647, %v2673
      %v2684 = vadd.f32 %v2648, %v2673
      %v2685 = vadd.f32 %v2649, %v2673
      %v2686 = vadd.f32 %v2650, %v2673
      %v2687 = vadd.f32 %v2651, %v2673
      %v2688 = vadd.f32 %v2652, %v2673
      %v2689 = vadd.f32 %v2653, %v2673
      %v2690 = vadd.f32 %v2654, %v2673
      %v2691 = vadd.f32 %v2655, %v2673
      %v2692 = vadd.f32 %v2656, %v2673
      %v2693 = vadd.f32 %v2657, %v2673
      %v2694 = vadd.f32 %v2658, %v2673
      %v2695 = vadd.f32 %v2659, %v2673
      %v2696 = vadd.f32 %v2660, %v2673
      %v2697 = vadd.f32 %v2661, %v2673
      %v2698 = vadd.f32 %v2662, %v2673
      %v2699 = vadd.f32 %v2663, %v2673
      %v2700 = vadd.f32 %v2664, %v2673
      %v2701 = vadd.f32 %v2665, %v2673
      %v2702 = vadd.f32 %v2666, %v2673
      %v2703 = vadd.f32 %v2667, %v2673
      %v2704 = vadd.f32 %v2668, %v2673
      %v2705 = vadd.f32 %v2669, %v2673
      %v2706 = vadd.f32 %v2670, %v2673
      %vm2707 = vcmask 261120
      %2708 = vst.msk [vmem:[%s224] sm:$0xff] %vm2707, %v2675
      %2709 = vst.msk [vmem:[%s224 + $0x8] sm:$0xff] %vm2707, %v2676
      %2710 = vst.msk [vmem:[%s224 + $0x10] sm:$0xff] %vm2707, %v2677
      %2711 = vst.msk [vmem:[%s224 + $0x18] sm:$0xff] %vm2707, %v2678
      %2712 = vst.msk [vmem:[%s224 + $0x20] sm:$0xff] %vm2707, %v2679
      %2713 = vst.msk [vmem:[%s224 + $0x28] sm:$0xff] %vm2707, %v2680
      %2714 = vst.msk [vmem:[%s224 + $0x30] sm:$0xff] %vm2707, %v2681
      %2715 = vst.msk [vmem:[%s224 + $0x38] sm:$0xff] %vm2707, %v2682
      %2716 = vst.msk [vmem:[%s224 + $0x40] sm:$0xff] %vm2707, %v2683
      %2717 = vst.msk [vmem:[%s224 + $0x48] sm:$0xff] %vm2707, %v2684
      %2718 = vst.msk [vmem:[%s224 + $0x50] sm:$0xff] %vm2707, %v2685
      %2719 = vst.msk [vmem:[%s224 + $0x58] sm:$0xff] %vm2707, %v2686
      %2720 = vst.msk [vmem:[%s224 + $0x60] sm:$0xff] %vm2707, %v2687
      %2721 = vst.msk [vmem:[%s224 + $0x68] sm:$0xff] %vm2707, %v2688
      %2722 = vst.msk [vmem:[%s224 + $0x70] sm:$0xff] %vm2707, %v2689
      %2723 = vst.msk [vmem:[%s224 + $0x78] sm:$0xff] %vm2707, %v2690
      %2724 = vst.msk [vmem:[%s224 + $0x80] sm:$0xff] %vm2707, %v2691
      %2725 = vst.msk [vmem:[%s224 + $0x88] sm:$0xff] %vm2707, %v2692
      %2726 = vst.msk [vmem:[%s224 + $0x90] sm:$0xff] %vm2707, %v2693
      %2727 = vst.msk [vmem:[%s224 + $0x98] sm:$0xff] %vm2707, %v2694
      %2728 = vst.msk [vmem:[%s224 + $0xa0] sm:$0xff] %vm2707, %v2695
      %2729 = vst.msk [vmem:[%s224 + $0xa8] sm:$0xff] %vm2707, %v2696
      %2730 = vst.msk [vmem:[%s224 + $0xb0] sm:$0xff] %vm2707, %v2697
      %2731 = vst.msk [vmem:[%s224 + $0xb8] sm:$0xff] %vm2707, %v2698
      %2732 = vst.msk [vmem:[%s224 + $0xc0] sm:$0xff] %vm2707, %v2699
      %2733 = vst.msk [vmem:[%s224 + $0xc8] sm:$0xff] %vm2707, %v2700
      %2734 = vst.msk [vmem:[%s224 + $0xd0] sm:$0xff] %vm2707, %v2701
      %2735 = vst.msk [vmem:[%s224 + $0xd8] sm:$0xff] %vm2707, %v2702
      %2736 = vst.msk [vmem:[%s224 + $0xe0] sm:$0xff] %vm2707, %v2703
      %2737 = vst.msk [vmem:[%s224 + $0xe8] sm:$0xff] %vm2707, %v2704
      %2738 = vst.msk [vmem:[%s224 + $0xf0] sm:$0xff] %vm2707, %v2705
      %2739 = vst.msk [vmem:[%s224 + $0xf8] sm:$0xff] %vm2707, %v2706
      %p2740 = scmp.lt.s32.totalorder %s16, 1
      %s2741 = scalar_select %p2740, %s16, 1
      %s2742 = smul.addr %s2741, 32
      %s2743 = smul.addr %s2742, 8
      %s2744 = scalar_lea.vmem %s5, %s2743
      // Predicated region
      $region41: #{segmap_encoder_pallas.1} parent=39 // pred_check
        %p2745 = pneg %p144
      $region42: #{segmap_encoder_pallas.1} parent=39 // pred_check_branch
        %2747 = sbr.rel (%p2745) target = $region44
      $region43: #{segmap_encoder_pallas.1} parent=39 // pred_region
        _
      $region44: #{segmap_encoder_pallas.1} parent=39 // pred_fallthru
        _
    $region40: #{segmap_encoder_pallas.1} parent=5 // pred_fallthru
      _
    %p2748 = scmp.le.s32.totalorder 2, %s11
    // Predicated region
    $region45: #{segmap_encoder_pallas.1} parent=5 // pred_check
      %p2749 = pneg %p2748
    $region46: #{segmap_encoder_pallas.1} parent=5 // pred_check_branch
      %2751 = sbr.rel (%p2749) target = $region48
    $region47: #{segmap_encoder_pallas.1} parent=5 // pred_region
      %s2752 = ssub.s32 %s11, 2
      // Predicated region
      $region49: #{segmap_encoder_pallas.1} parent=47 // pred_check
        %p2753 = pneg %p150
      $region50: #{segmap_encoder_pallas.1} parent=47 // pred_check_branch
        %2755 = sbr.rel (%p2753) target = $region52
      $region51: #{segmap_encoder_pallas.1} parent=47 // pred_region
        %p2756 = scmp.lt.s32.totalorder %s17, 1
        %s2757 = scalar_select %p2756, %s17, 1
        %s2758 = smul.addr %s2757, 32
        %s2759 = smul.addr %s2758, 8
        %s2760 = scalar_lea.vmem %s5, %s2759
      $region52: #{segmap_encoder_pallas.1} parent=47 // pred_fallthru
        _
    $region48: #{segmap_encoder_pallas.1} parent=5 // pred_fallthru
      _
  $region6: #{segmap_encoder_pallas.1} parent=0 // loop_footer
    %s15 = sadd.s32 1, %s11
  $region7: #{segmap_encoder_pallas.1} parent=0 // loop_footer_branch
    %10 = sbr.rel target = $region3
  $region8: #{segmap_encoder_pallas.1} parent=0 // loop_exit
    _

</llo_original>
